<compile_context>
chip_gen: v7x
topology: tpu7x:2x2x1
jax: 0.10.0
libtpu: 0.0.40
codegen_flags: <defaults>
</compile_context>

<pallas_src>
import functools

import jax
import jax.numpy as jnp
from jax.experimental import pallas as pl
from jax.experimental.pallas import tpu as pltpu

# ---------------------------------------------------------------------------
# Model dims (from nn.Linear declarations in NetShortCircuit.__init__)
# Forward is purely sequential: fc1..fc5 (+ReLU each) then fc7, no skip path.
# ---------------------------------------------------------------------------
DIMS = [16, 128, 256, 128, 128, 256, 350]   # fc1..fc5, fc7

# Resident bf16 weights + f32 biases (grid-invariant, single-buffered).
_WEIGHT_BYTES = sum(di * do * 2 + do * 4 for di, do in zip(DIMS[:-1], DIMS[1:]))


def _round_up(x, m):
    return (x + m - 1) // m * m


def _vmem_limit_bytes(tile, out_dtype):
    """Right-size the scoped-VMEM limit to the actual footprint of `tile`."""
    out_bytes = jnp.dtype(out_dtype).itemsize
    io = 2 * tile * (DIMS[0] * 4 + DIMS[-1] * out_bytes)   # double-buffered in/out tiles
    act = 3 * tile * 256 * 4                               # live chained f32 intermediates + bf16 copies
    est = _WEIGHT_BYTES + io + act
    # 2x safety margin, floored so tiny tiles don't starve the compiler,
    # capped well under v7x's 64 MiB/TC.
    return int(min(max(2 * est, 24 * 1024 * 1024), 48 * 1024 * 1024))


def mlp_kernel(x_ref,
               w1_ref, b1_ref,
               w2_ref, b2_ref,
               w3_ref, b3_ref,
               w4_ref, b4_ref,
               w5_ref, b5_ref,
               w7_ref, b7_ref,
               o_ref):
    """Fused forward: 6 bf16 matmuls (f32 accum) + f32 bias, ReLU on first 5."""
    h = x_ref[...]   # f32 [tile_b, 16]; cast to bf16 per-layer below

    def linear(h, w_ref, b_ref, relu):
        # bf16 x bf16 -> f32 accumulation on the MXU; bias/ReLU stay f32 (VPU).
        y = jnp.dot(h.astype(jnp.bfloat16), w_ref[...],
                    preferred_element_type=jnp.float32)
        y = y + b_ref[...]
        if relu:
            y = jnp.maximum(y, 0.0)
        return y

    h = linear(h, w1_ref, b1_ref, True)
    h = linear(h, w2_ref, b2_ref, True)
    h = linear(h, w3_ref, b3_ref, True)
    h = linear(h, w4_ref, b4_ref, True)
    h = linear(h, w5_ref, b5_ref, True)
    h = linear(h, w7_ref, b7_ref, False)     # fc7: no activation

    o_ref[...] = h.astype(o_ref.dtype)


@functools.partial(jax.jit, static_argnames=("tile_b", "out_dtype"))
def net_short_circuit_forward(x, params, *, tile_b=2048, out_dtype=jnp.float32):
    """x: [B, 16] float32. params: list of (W[in, out], b[1, out]) per layer.

    tile_b: max batch tile. 2048 amortizes grid-step overhead while keeping
    the footprint ~25-30 MiB incl. double buffers (fits v7x's 64 MiB/TC).
    The tile is additionally capped at ceil(B/2) (rounded to 8) so the grid
    has >= 2 steps and both v7x TensorCores get work.
    """
    B, in_dim = x.shape
    assert in_dim == DIMS[0]
    out_dim = DIMS[-1]

    # Effective batch tile: big by default, but (a) never larger than needed
    # and (b) small enough that the grid has at least 2 steps when B > 8.
    B_ceil = _round_up(B, 8)
    half = _round_up((B_ceil + 1) // 2, 8)
    tile_eff = max(8, min(tile_b, half))
    B_pad = _round_up(B, tile_eff)
    grid = (B_pad // tile_eff,)

    # Batch padding only (f32 x goes straight in; bf16 cast happens in-kernel).
    x_p = jnp.pad(x, ((0, B_pad - B), (0, 0))) if B_pad != B else x

    flat_params = []
    weight_specs = []
    for w, b in params:
        w = w.astype(jnp.bfloat16)    # bf16 weights into the MXU
        b = b.astype(jnp.float32)     # f32 bias added to the f32 accumulator
        # Grid-invariant blocks: single-buffer them (no refetch, half VMEM).
        weight_specs.append(pl.BlockSpec(w.shape, lambda i: (0, 0),
                                         pipeline_mode=pl.Buffered(1)))
        weight_specs.append(pl.BlockSpec(b.shape, lambda i: (0, 0),
                                         pipeline_mode=pl.Buffered(1)))
        flat_params.extend([w, b])

    in_specs = ([pl.BlockSpec((tile_eff, in_dim), lambda i: (i, 0))]
                + weight_specs)
    # Output block covers the full 350-column last dim (allowed since it
    # equals the array dim): no 350->384 pad, no post-kernel column slice.
    out_specs = pl.BlockSpec((tile_eff, out_dim), lambda i: (i, 0))

    out = pl.pallas_call(
        mlp_kernel,
        out_shape=jax.ShapeDtypeStruct((B_pad, out_dim), out_dtype),
        grid_spec=pltpu.PrefetchScalarGridSpec(
            num_scalar_prefetch=0,
            grid=grid,
            in_specs=in_specs,
            out_specs=out_specs,
        ),
        compiler_params=pltpu.CompilerParams(
            dimension_semantics=("parallel",),   # batch axis -> megacore / 2 TCs
            vmem_limit_bytes=_vmem_limit_bytes(tile_eff, out_dtype),
        ),
    )(x_p, *flat_params)

    # Strip batch padding only (no-op when B is a multiple of the tile).
    return out[:B] if B_pad != B else out


def init_params(key):
    """Deterministic init mimicking PyTorch's default Linear init
    (uniform in +/- 1/sqrt(fan_in)). Weights stored as [in, out]."""
    params = []
    for i in range(len(DIMS) - 1):
        fan_in, fan_out = DIMS[i], DIMS[i + 1]
        key, kw, kb = jax.random.split(key, 3)
        bound = 1.0 / jnp.sqrt(jnp.float32(fan_in))
        w = jax.random.uniform(kw, (fan_in, fan_out), jnp.float32,
                               minval=-bound, maxval=bound)
        b = jax.random.uniform(kb, (1, fan_out), jnp.float32,
                               minval=-bound, maxval=bound)
        params.append((w, b))
    return params


def reference_forward(x, params):
    """Plain-JAX reference mirroring the kernel's bf16-matmul / f32-accum math."""
    h = x
    n = len(params)
    for li, (w, b) in enumerate(params):
        y = jnp.dot(h.astype(jnp.bfloat16), w.astype(jnp.bfloat16),
                    preferred_element_type=jnp.float32) + b.astype(jnp.float32)
        h = jnp.maximum(y, 0.0) if li < n - 1 else y
    return h


def reference_forward_f32(x, params):
    """Full-f32 reference (PyTorch nn.Linear semantics) for a sanity diff."""
    h = x
    n = len(params)
    for li, (w, b) in enumerate(params):
        y = jnp.dot(h, w) + b
        h = jnp.maximum(y, 0.0) if li < n - 1 else y
    return h


if __name__ == "__main__":
    key = jax.random.PRNGKey(0)
    key, kx = jax.random.split(key)
    params = init_params(key)

    # Small ragged batch: exercises padding and the >=2-step grid (tile=8).
    B = 12
    x = jax.random.normal(kx, (B, DIMS[0]), jnp.float32)
    out = jax.block_until_ready(net_short_circuit_forward(x, params))
    assert out.shape == (B, DIMS[-1]), out.shape
    ref = reference_forward(x, params)
    max_err = float(jnp.max(jnp.abs(out - ref)))
    assert max_err < 1e-2, max_err
    # Informational only: deviation from true f32 nn.Linear math (bf16 MXU).
    f32_err = float(jnp.max(jnp.abs(out - reference_forward_f32(x, params))))

    # Larger batch: exercises the production tile (2048 rows, grid of 2).
    key, kx2 = jax.random.split(key)
    B2 = 4096
    x2 = jax.random.normal(kx2, (B2, DIMS[0]), jnp.float32)
    out2 = jax.block_until_ready(net_short_circuit_forward(x2, params))
    assert out2.shape == (B2, DIMS[-1]), out2.shape
    ref2 = reference_forward(x2, params)
    max_err2 = float(jnp.max(jnp.abs(out2 - ref2)))
    assert max_err2 < 1e-2, max_err2

    print("KERNEL_OK")
</pallas_src>

<mosaic_0001>
module attributes {stable_mosaic.version = 11 : i64} {
  func.func @mlp_kernel(%arg0: i32, %arg1: memref<8x16xf32, #tpu.memory_space<vmem>>, %arg2: memref<16x128xbf16, #tpu.memory_space<vmem>>, %arg3: memref<1x128xf32, #tpu.memory_space<vmem>>, %arg4: memref<128x256xbf16, #tpu.memory_space<vmem>>, %arg5: memref<1x256xf32, #tpu.memory_space<vmem>>, %arg6: memref<256x128xbf16, #tpu.memory_space<vmem>>, %arg7: memref<1x128xf32, #tpu.memory_space<vmem>>, %arg8: memref<128x128xbf16, #tpu.memory_space<vmem>>, %arg9: memref<1x128xf32, #tpu.memory_space<vmem>>, %arg10: memref<128x256xbf16, #tpu.memory_space<vmem>>, %arg11: memref<1x256xf32, #tpu.memory_space<vmem>>, %arg12: memref<256x350xbf16, #tpu.memory_space<vmem>>, %arg13: memref<1x350xf32, #tpu.memory_space<vmem>>, %arg14: memref<8x350xf32, #tpu.memory_space<vmem>>) attributes {dimension_semantics = [#tpu.dimension_semantics<parallel>], iteration_bounds = array<i64: 2>, scalar_prefetch = 0 : i64, scratch_operands = 0 : i64, tpu.core_type = #tpu.core_type<tc>, window_params = [{transform_indices = @transform_0, window_bounds = array<i64: 8, 16>}, {pipeline_mode = #tpu.pipeline_mode<synchronous>, transform_indices = @transform_1, window_bounds = array<i64: 16, 128>}, {pipeline_mode = #tpu.pipeline_mode<synchronous>, transform_indices = @transform_2, window_bounds = array<i64: 1, 128>}, {pipeline_mode = #tpu.pipeline_mode<synchronous>, transform_indices = @transform_3, window_bounds = array<i64: 128, 256>}, {pipeline_mode = #tpu.pipeline_mode<synchronous>, transform_indices = @transform_4, window_bounds = array<i64: 1, 256>}, {pipeline_mode = #tpu.pipeline_mode<synchronous>, transform_indices = @transform_5, window_bounds = array<i64: 256, 128>}, {pipeline_mode = #tpu.pipeline_mode<synchronous>, transform_indices = @transform_6, window_bounds = array<i64: 1, 128>}, {pipeline_mode = #tpu.pipeline_mode<synchronous>, transform_indices = @transform_7, window_bounds = array<i64: 128, 128>}, {pipeline_mode = #tpu.pipeline_mode<synchronous>, transform_indices = @transform_8, window_bounds = array<i64: 1, 128>}, {pipeline_mode = #tpu.pipeline_mode<synchronous>, transform_indices = @transform_9, window_bounds = array<i64: 128, 256>}, {pipeline_mode = #tpu.pipeline_mode<synchronous>, transform_indices = @transform_10, window_bounds = array<i64: 1, 256>}, {pipeline_mode = #tpu.pipeline_mode<synchronous>, transform_indices = @transform_11, window_bounds = array<i64: 256, 350>}, {pipeline_mode = #tpu.pipeline_mode<synchronous>, transform_indices = @transform_12, window_bounds = array<i64: 1, 350>}, {transform_indices = @transform_13, window_bounds = array<i64: 8, 350>}]} {
    %c0 = arith.constant 0 : index
    %c0_0 = arith.constant 0 : index
    %0 = vector.load %arg1[%c0, %c0_0] : memref<8x16xf32, #tpu.memory_space<vmem>>, vector<8x16xf32>
    %1 = arith.truncf %0 : vector<8x16xf32> to vector<8x16xbf16>
    %c0_1 = arith.constant 0 : index
    %c0_2 = arith.constant 0 : index
    %2 = vector.load %arg2[%c0_1, %c0_2] : memref<16x128xbf16, #tpu.memory_space<vmem>>, vector<16x128xbf16>
    %cst = arith.constant dense<0.000000e+00> : vector<8x128xf32>
    %3 = tpu.matmul %1, %2, %cst {dimension_numbers = #tpu.dot_dimension_numbers<[1], [0], [0], [1], [0, 0, 1, 1], [], []>} : vector<8x16xbf16>, vector<16x128xbf16>, vector<8x128xf32> -> vector<8x128xf32>
    %c0_3 = arith.constant 0 : index
    %c0_4 = arith.constant 0 : index
    %4 = vector.load %arg3[%c0_3, %c0_4] : memref<1x128xf32, #tpu.memory_space<vmem>>, vector<1x128xf32>
    %5 = vector.broadcast %4 : vector<1x128xf32> to vector<8x128xf32>
    %6 = arith.addf %3, %5 : vector<8x128xf32>
    %cst_5 = arith.constant 0.000000e+00 : f32
    %7 = vector.broadcast %cst_5 : f32 to vector<8x128xf32>
    %8 = arith.maximumf %6, %7 : vector<8x128xf32>
    %9 = arith.truncf %8 : vector<8x128xf32> to vector<8x128xbf16>
    %c0_6 = arith.constant 0 : index
    %c0_7 = arith.constant 0 : index
    %10 = vector.load %arg4[%c0_6, %c0_7] : memref<128x256xbf16, #tpu.memory_space<vmem>>, vector<128x256xbf16>
    %cst_8 = arith.constant dense<0.000000e+00> : vector<8x256xf32>
    %11 = tpu.matmul %9, %10, %cst_8 {dimension_numbers = #tpu.dot_dimension_numbers<[1], [0], [0], [1], [0, 0, 1, 1], [], []>} : vector<8x128xbf16>, vector<128x256xbf16>, vector<8x256xf32> -> vector<8x256xf32>
    %c0_9 = arith.constant 0 : index
    %c0_10 = arith.constant 0 : index
    %12 = vector.load %arg5[%c0_9, %c0_10] : memref<1x256xf32, #tpu.memory_space<vmem>>, vector<1x256xf32>
    %13 = vector.broadcast %12 : vector<1x256xf32> to vector<8x256xf32>
    %14 = arith.addf %11, %13 : vector<8x256xf32>
    %cst_11 = arith.constant 0.000000e+00 : f32
    %15 = vector.broadcast %cst_11 : f32 to vector<8x256xf32>
    %16 = arith.maximumf %14, %15 : vector<8x256xf32>
    %17 = arith.truncf %16 : vector<8x256xf32> to vector<8x256xbf16>
    %c0_12 = arith.constant 0 : index
    %c0_13 = arith.constant 0 : index
    %18 = vector.load %arg6[%c0_12, %c0_13] : memref<256x128xbf16, #tpu.memory_space<vmem>>, vector<256x128xbf16>
    %cst_14 = arith.constant dense<0.000000e+00> : vector<8x128xf32>
    %19 = tpu.matmul %17, %18, %cst_14 {dimension_numbers = #tpu.dot_dimension_numbers<[1], [0], [0], [1], [0, 0, 1, 1], [], []>} : vector<8x256xbf16>, vector<256x128xbf16>, vector<8x128xf32> -> vector<8x128xf32>
    %c0_15 = arith.constant 0 : index
    %c0_16 = arith.constant 0 : index
    %20 = vector.load %arg7[%c0_15, %c0_16] : memref<1x128xf32, #tpu.memory_space<vmem>>, vector<1x128xf32>
    %21 = vector.broadcast %20 : vector<1x128xf32> to vector<8x128xf32>
    %22 = arith.addf %19, %21 : vector<8x128xf32>
    %cst_17 = arith.constant 0.000000e+00 : f32
    %23 = vector.broadcast %cst_17 : f32 to vector<8x128xf32>
    %24 = arith.maximumf %22, %23 : vector<8x128xf32>
    %25 = arith.truncf %24 : vector<8x128xf32> to vector<8x128xbf16>
    %c0_18 = arith.constant 0 : index
    %c0_19 = arith.constant 0 : index
    %26 = vector.load %arg8[%c0_18, %c0_19] : memref<128x128xbf16, #tpu.memory_space<vmem>>, vector<128x128xbf16>
    %cst_20 = arith.constant dense<0.000000e+00> : vector<8x128xf32>
    %27 = tpu.matmul %25, %26, %cst_20 {dimension_numbers = #tpu.dot_dimension_numbers<[1], [0], [0], [1], [0, 0, 1, 1], [], []>} : vector<8x128xbf16>, vector<128x128xbf16>, vector<8x128xf32> -> vector<8x128xf32>
    %c0_21 = arith.constant 0 : index
    %c0_22 = arith.constant 0 : index
    %28 = vector.load %arg9[%c0_21, %c0_22] : memref<1x128xf32, #tpu.memory_space<vmem>>, vector<1x128xf32>
    %29 = vector.broadcast %28 : vector<1x128xf32> to vector<8x128xf32>
    %30 = arith.addf %27, %29 : vector<8x128xf32>
    %cst_23 = arith.constant 0.000000e+00 : f32
    %31 = vector.broadcast %cst_23 : f32 to vector<8x128xf32>
    %32 = arith.maximumf %30, %31 : vector<8x128xf32>
    %33 = arith.truncf %32 : vector<8x128xf32> to vector<8x128xbf16>
    %c0_24 = arith.constant 0 : index
    %c0_25 = arith.constant 0 : index
    %34 = vector.load %arg10[%c0_24, %c0_25] : memref<128x256xbf16, #tpu.memory_space<vmem>>, vector<128x256xbf16>
    %cst_26 = arith.constant dense<0.000000e+00> : vector<8x256xf32>
    %35 = tpu.matmul %33, %34, %cst_26 {dimension_numbers = #tpu.dot_dimension_numbers<[1], [0], [0], [1], [0, 0, 1, 1], [], []>} : vector<8x128xbf16>, vector<128x256xbf16>, vector<8x256xf32> -> vector<8x256xf32>
    %c0_27 = arith.constant 0 : index
    %c0_28 = arith.constant 0 : index
    %36 = vector.load %arg11[%c0_27, %c0_28] : memref<1x256xf32, #tpu.memory_space<vmem>>, vector<1x256xf32>
    %37 = vector.broadcast %36 : vector<1x256xf32> to vector<8x256xf32>
    %38 = arith.addf %35, %37 : vector<8x256xf32>
    %cst_29 = arith.constant 0.000000e+00 : f32
    %39 = vector.broadcast %cst_29 : f32 to vector<8x256xf32>
    %40 = arith.maximumf %38, %39 : vector<8x256xf32>
    %41 = arith.truncf %40 : vector<8x256xf32> to vector<8x256xbf16>
    %c0_30 = arith.constant 0 : index
    %c0_31 = arith.constant 0 : index
    %42 = vector.load %arg12[%c0_30, %c0_31] : memref<256x350xbf16, #tpu.memory_space<vmem>>, vector<256x350xbf16>
    %cst_32 = arith.constant dense<0.000000e+00> : vector<8x350xf32>
    %43 = tpu.matmul %41, %42, %cst_32 {dimension_numbers = #tpu.dot_dimension_numbers<[1], [0], [0], [1], [0, 0, 1, 1], [], []>} : vector<8x256xbf16>, vector<256x350xbf16>, vector<8x350xf32> -> vector<8x350xf32>
    %c0_33 = arith.constant 0 : index
    %c0_34 = arith.constant 0 : index
    %44 = vector.load %arg13[%c0_33, %c0_34] : memref<1x350xf32, #tpu.memory_space<vmem>>, vector<1x350xf32>
    %45 = vector.broadcast %44 : vector<1x350xf32> to vector<8x350xf32>
    %46 = arith.addf %43, %45 : vector<8x350xf32>
    %c0_35 = arith.constant 0 : index
    %c0_36 = arith.constant 0 : index
    %47 = vector.load %arg14[%c0_35, %c0_36] : memref<8x350xf32, #tpu.memory_space<vmem>>, vector<8x350xf32>
    tpu.vector_store %arg14[%c0_35, %c0_36], %46 {strides = array<i32>} : memref<8x350xf32, #tpu.memory_space<vmem>>, vector<8x350xf32>,
    return
  }
  func.func @transform_0(%arg0: i32) -> (i32, i32) {
    %c0_i32 = arith.constant 0 : i32
    %c0_i32_0 = arith.constant 0 : i32
    return %arg0, %c0_i32 : i32, i32
  }
  func.func @transform_1(%arg0: i32) -> (i32, i32) {
    %c0_i32 = arith.constant 0 : i32
    %c0_i32_0 = arith.constant 0 : i32
    %c0_i32_1 = arith.constant 0 : i32
    return %c0_i32, %c0_i32_0 : i32, i32
  }
  func.func @transform_2(%arg0: i32) -> (i32, i32) {
    %c0_i32 = arith.constant 0 : i32
    %c0_i32_0 = arith.constant 0 : i32
    %c0_i32_1 = arith.constant 0 : i32
    return %c0_i32, %c0_i32_0 : i32, i32
  }
  func.func @transform_3(%arg0: i32) -> (i32, i32) {
    %c0_i32 = arith.constant 0 : i32
    %c0_i32_0 = arith.constant 0 : i32
    %c0_i32_1 = arith.constant 0 : i32
    return %c0_i32, %c0_i32_0 : i32, i32
  }
  func.func @transform_4(%arg0: i32) -> (i32, i32) {
    %c0_i32 = arith.constant 0 : i32
    %c0_i32_0 = arith.constant 0 : i32
    %c0_i32_1 = arith.constant 0 : i32
    return %c0_i32, %c0_i32_0 : i32, i32
  }
  func.func @transform_5(%arg0: i32) -> (i32, i32) {
    %c0_i32 = arith.constant 0 : i32
    %c0_i32_0 = arith.constant 0 : i32
    %c0_i32_1 = arith.constant 0 : i32
    return %c0_i32, %c0_i32_0 : i32, i32
  }
  func.func @transform_6(%arg0: i32) -> (i32, i32) {
    %c0_i32 = arith.constant 0 : i32
    %c0_i32_0 = arith.constant 0 : i32
    %c0_i32_1 = arith.constant 0 : i32
    return %c0_i32, %c0_i32_0 : i32, i32
  }
  func.func @transform_7(%arg0: i32) -> (i32, i32) {
    %c0_i32 = arith.constant 0 : i32
    %c0_i32_0 = arith.constant 0 : i32
    %c0_i32_1 = arith.constant 0 : i32
    return %c0_i32, %c0_i32_0 : i32, i32
  }
  func.func @transform_8(%arg0: i32) -> (i32, i32) {
    %c0_i32 = arith.constant 0 : i32
    %c0_i32_0 = arith.constant 0 : i32
    %c0_i32_1 = arith.constant 0 : i32
    return %c0_i32, %c0_i32_0 : i32, i32
  }
  func.func @transform_9(%arg0: i32) -> (i32, i32) {
    %c0_i32 = arith.constant 0 : i32
    %c0_i32_0 = arith.constant 0 : i32
    %c0_i32_1 = arith.constant 0 : i32
    return %c0_i32, %c0_i32_0 : i32, i32
  }
  func.func @transform_10(%arg0: i32) -> (i32, i32) {
    %c0_i32 = arith.constant 0 : i32
    %c0_i32_0 = arith.constant 0 : i32
    %c0_i32_1 = arith.constant 0 : i32
    return %c0_i32, %c0_i32_0 : i32, i32
  }
  func.func @transform_11(%arg0: i32) -> (i32, i32) {
    %c0_i32 = arith.constant 0 : i32
    %c0_i32_0 = arith.constant 0 : i32
    %c0_i32_1 = arith.constant 0 : i32
    return %c0_i32, %c0_i32_0 : i32, i32
  }
  func.func @transform_12(%arg0: i32) -> (i32, i32) {
    %c0_i32 = arith.constant 0 : i32
    %c0_i32_0 = arith.constant 0 : i32
    %c0_i32_1 = arith.constant 0 : i32
    return %c0_i32, %c0_i32_0 : i32, i32
  }
  func.func @transform_13(%arg0: i32) -> (i32, i32) {
    %c0_i32 = arith.constant 0 : i32
    %c0_i32_0 = arith.constant 0 : i32
    return %arg0, %c0_i32 : i32, i32
  }
}

</mosaic_0001>

<llo_original>
// kernel: net_short_circuit_forward.1
$region0: #{net_short_circuit_forward.1}
  #allocation0 [shape = 'u32[]', space=smem, size = 0x4, offset = 0x4, fixed_abs, tag = 'smem constant byte address 0x4 - core index']
  #allocation1 [shape = 'u32[144,128]{1,0:T(1,128)}', space=vmem, size = 0x12000, scoped, tag = 'internal scratch']
  %s0 = inlined_call_operand.vmem [shape: f32[16,16], index: 0, kind: input, shape index: {}]
  %s1 = inlined_call_operand.vmem [shape: bf16[16,128], index: 1, kind: input, shape index: {}]
  %s2 = inlined_call_operand.vmem [shape: f32[1,128], index: 2, kind: input, shape index: {}]
  %s3 = inlined_call_operand.vmem [shape: bf16[128,256], index: 3, kind: input, shape index: {}]
  %s4 = inlined_call_operand.vmem [shape: f32[1,256], index: 4, kind: input, shape index: {}]
  %s5 = inlined_call_operand.vmem [shape: bf16[256,128], index: 5, kind: input, shape index: {}]
  %s6 = inlined_call_operand.vmem [shape: f32[1,128], index: 6, kind: input, shape index: {}]
  %s7 = inlined_call_operand.vmem [shape: bf16[128,128], index: 7, kind: input, shape index: {}]
  %s8 = inlined_call_operand.vmem [shape: f32[1,128], index: 8, kind: input, shape index: {}]
  %s9 = inlined_call_operand.vmem [shape: bf16[128,256], index: 9, kind: input, shape index: {}]
  %s10 = inlined_call_operand.vmem [shape: f32[1,256], index: 10, kind: input, shape index: {}]
  %s11 = inlined_call_operand.vmem [shape: bf16[256,350], index: 11, kind: input, shape index: {}]
  %s12 = inlined_call_operand.vmem [shape: f32[1,350], index: 12, kind: input, shape index: {}]
  %s13 = inlined_call_operand.hbm [shape: f32[16,350], index: 13, kind: output, shape index: {}]
  %s14 = sld [smem:[#allocation0]]
  $region85: #{net_short_circuit_forward.1} parent=0
    _
  %s16 = ssub.s32 1, %s14
  %s17 = scalar_select 0, %s16, %s14
  $region1: #{net_short_circuit_forward.1} parent=0
    #allocation2 [shape = 'u8[24576]{0}', space=vmem, size = 0x6000, scoped, tag = 'output window, operand 0']
    #allocation3 [shape = 's32[2]{0}', space=sflag, size = 0x8, scoped, tag = 'scoped memory for net_short_circuit_forward.1']
    %18 = vsyncpa [#allocation3], 0
    %s19 = scalar_lea.sflag [#allocation3], 1
    %20 = vsyncpa %s19, 0
    loop: start=0, step=1, limit=4
    $region2: #{net_short_circuit_forward.1} parent=1 // loop_pre_header
      _
    $region3: #{net_short_circuit_forward.1} parent=1 // loop_header
      %s22 = sphi 0, %s26
      %p23 = scmp.ge.s32.totalorder %s22, 4
      %s32 = sphi 0, %s34
      %s35 = sphi 0, %s32
      %s36 = sphi 0, %s35
      %s52 = sphi 0, %s36
      %s56 = sphi 0, %s56
      %s58 = sphi 0, %s56
      %s59 = sphi 0, %s58
      %s73 = sphi 0, %s59
      %s77 = sphi 0, %s77
      %s79 = sphi 0, %s77
      %s80 = sphi 0, %s79
      %s94 = sphi 0, %s80
      %s98 = sphi 0, %s98
      %s100 = sphi 0, %s98
      %s101 = sphi 0, %s100
      %s115 = sphi 0, %s101
      %s119 = sphi 0, %s119
      %s121 = sphi 0, %s119
      %s122 = sphi 0, %s121
      %s136 = sphi 0, %s122
      %s140 = sphi 0, %s140
      %s142 = sphi 0, %s140
      %s143 = sphi 0, %s142
      %s157 = sphi 0, %s143
      %s161 = sphi 0, %s161
      %s163 = sphi 0, %s161
      %s164 = sphi 0, %s163
      %s178 = sphi 0, %s164
      %s182 = sphi 0, %s182
      %s184 = sphi 0, %s182
      %s185 = sphi 0, %s184
      %s199 = sphi 0, %s185
      %s203 = sphi 0, %s203
      %s205 = sphi 0, %s203
      %s206 = sphi 0, %s205
      %s220 = sphi 0, %s206
      %s224 = sphi 0, %s224
      %s226 = sphi 0, %s224
      %s227 = sphi 0, %s226
      %s241 = sphi 0, %s227
      %s245 = sphi 0, %s245
      %s247 = sphi 0, %s245
      %s248 = sphi 0, %s247
      %s262 = sphi 0, %s248
      %s266 = sphi 0, %s266
      %s268 = sphi 0, %s266
      %s269 = sphi 0, %s268
      %s283 = sphi 0, %s269
      %s287 = sphi 0, %s287
      %s289 = sphi 0, %s287
      %s290 = sphi 0, %s289
      %s304 = sphi 0, %s290
      %s310 = sphi 0, %s312
      %s313 = sphi 0, %s310
      %s314 = sphi 0, %s313
      %s330 = sphi 0, %s314
    $region4: #{net_short_circuit_forward.1} parent=1 // loop_header_branch
      %25 = sbr.rel (%p23) target = $region8
    $region5: #{net_short_circuit_forward.1} parent=1 // loop_body
      %s27 = ssub.s32 %s22, 1
      %s28 = ssub.s32 %s22, 2
      %s29 = sadd.s32 %s22, 1
      %s30 = ssub.s32 %s22, %s29
      %p31 = scmp.eq.s32.totalorder %s30, 0
      %s33 = sadd.s32 %s32, 1
      %s34 = scalar_select %p31, %s32, %s33
      %p37 = pneg %p31
      %p38 = scmp.eq.s32.totalorder %s22, 1
      %p39 = por %p37, %p38
      %p40 = scmp.ne.s32.totalorder %s32, %s35
      %p41 = scmp.eq.s32.totalorder %s22, 0
      %p42 = por %p40, %p41
      %p43 = scmp.ne.s32.totalorder %s32, %s35
      %p44 = scmp.eq.s32.totalorder %s27, 1
      %p45 = por %p43, %p44
      %p46 = scmp.ne.s32.totalorder %s35, %s36
      %p47 = scmp.eq.s32.totalorder %s27, 0
      %p48 = por %p46, %p47
      %p49 = scmp.ne.s32.totalorder %s35, %s36
      %p50 = scmp.eq.s32.totalorder %s28, 1
      %p51 = por %p49, %p50
      %p53 = scmp.ne.s32.totalorder %s36, %s52
      %p54 = scmp.eq.s32.totalorder %s28, 0
      %p55 = por %p53, %p54
      %s57 = sadd.s32 %s56, 1
      %p60 = scmp.eq.s32.totalorder %s22, 1
      %p61 = scmp.ne.s32.totalorder %s56, %s58
      %p62 = scmp.eq.s32.totalorder %s22, 0
      %p63 = por %p61, %p62
      %p64 = scmp.ne.s32.totalorder %s56, %s58
      %p65 = scmp.eq.s32.totalorder %s27, 1
      %p66 = por %p64, %p65
      %p67 = scmp.ne.s32.totalorder %s58, %s59
      %p68 = scmp.eq.s32.totalorder %s27, 0
      %p69 = por %p67, %p68
      %p70 = scmp.ne.s32.totalorder %s58, %s59
      %p71 = scmp.eq.s32.totalorder %s28, 1
      %p72 = por %p70, %p71
      %p74 = scmp.ne.s32.totalorder %s59, %s73
      %p75 = scmp.eq.s32.totalorder %s28, 0
      %p76 = por %p74, %p75
      %s78 = sadd.s32 %s77, 1
      %p81 = scmp.eq.s32.totalorder %s22, 1
      %p82 = scmp.ne.s32.totalorder %s77, %s79
      %p83 = scmp.eq.s32.totalorder %s22, 0
      %p84 = por %p82, %p83
      %p85 = scmp.ne.s32.totalorder %s77, %s79
      %p86 = scmp.eq.s32.totalorder %s27, 1
      %p87 = por %p85, %p86
      %p88 = scmp.ne.s32.totalorder %s79, %s80
      %p89 = scmp.eq.s32.totalorder %s27, 0
      %p90 = por %p88, %p89
      %p91 = scmp.ne.s32.totalorder %s79, %s80
      %p92 = scmp.eq.s32.totalorder %s28, 1
      %p93 = por %p91, %p92
      %p95 = scmp.ne.s32.totalorder %s80, %s94
      %p96 = scmp.eq.s32.totalorder %s28, 0
      %p97 = por %p95, %p96
      %s99 = sadd.s32 %s98, 1
      %p102 = scmp.eq.s32.totalorder %s22, 1
      %p103 = scmp.ne.s32.totalorder %s98, %s100
      %p104 = scmp.eq.s32.totalorder %s22, 0
      %p105 = por %p103, %p104
      %p106 = scmp.ne.s32.totalorder %s98, %s100
      %p107 = scmp.eq.s32.totalorder %s27, 1
      %p108 = por %p106, %p107
      %p109 = scmp.ne.s32.totalorder %s100, %s101
      %p110 = scmp.eq.s32.totalorder %s27, 0
      %p111 = por %p109, %p110
      %p112 = scmp.ne.s32.totalorder %s100, %s101
      %p113 = scmp.eq.s32.totalorder %s28, 1
      %p114 = por %p112, %p113
      %p116 = scmp.ne.s32.totalorder %s101, %s115
      %p117 = scmp.eq.s32.totalorder %s28, 0
      %p118 = por %p116, %p117
      %s120 = sadd.s32 %s119, 1
      %p123 = scmp.eq.s32.totalorder %s22, 1
      %p124 = scmp.ne.s32.totalorder %s119, %s121
      %p125 = scmp.eq.s32.totalorder %s22, 0
      %p126 = por %p124, %p125
      %p127 = scmp.ne.s32.totalorder %s119, %s121
      %p128 = scmp.eq.s32.totalorder %s27, 1
      %p129 = por %p127, %p128
      %p130 = scmp.ne.s32.totalorder %s121, %s122
      %p131 = scmp.eq.s32.totalorder %s27, 0
      %p132 = por %p130, %p131
      %p133 = scmp.ne.s32.totalorder %s121, %s122
      %p134 = scmp.eq.s32.totalorder %s28, 1
      %p135 = por %p133, %p134
      %p137 = scmp.ne.s32.totalorder %s122, %s136
      %p138 = scmp.eq.s32.totalorder %s28, 0
      %p139 = por %p137, %p138
      %s141 = sadd.s32 %s140, 1
      %p144 = scmp.eq.s32.totalorder %s22, 1
      %p145 = scmp.ne.s32.totalorder %s140, %s142
      %p146 = scmp.eq.s32.totalorder %s22, 0
      %p147 = por %p145, %p146
      %p148 = scmp.ne.s32.totalorder %s140, %s142
      %p149 = scmp.eq.s32.totalorder %s27, 1
      %p150 = por %p148, %p149
      %p151 = scmp.ne.s32.totalorder %s142, %s143
      %p152 = scmp.eq.s32.totalorder %s27, 0
      %p153 = por %p151, %p152
      %p154 = scmp.ne.s32.totalorder %s142, %s143
      %p155 = scmp.eq.s32.totalorder %s28, 1
      %p156 = por %p154, %p155
      %p158 = scmp.ne.s32.totalorder %s143, %s157
      %p159 = scmp.eq.s32.totalorder %s28, 0
      %p160 = por %p158, %p159
      %s162 = sadd.s32 %s161, 1
      %p165 = scmp.eq.s32.totalorder %s22, 1
      %p166 = scmp.ne.s32.totalorder %s161, %s163
      %p167 = scmp.eq.s32.totalorder %s22, 0
      %p168 = por %p166, %p167
      %p169 = scmp.ne.s32.totalorder %s161, %s163
      %p170 = scmp.eq.s32.totalorder %s27, 1
      %p171 = por %p169, %p170
      %p172 = scmp.ne.s32.totalorder %s163, %s164
      %p173 = scmp.eq.s32.totalorder %s27, 0
      %p174 = por %p172, %p173
      %p175 = scmp.ne.s32.totalorder %s163, %s164
      %p176 = scmp.eq.s32.totalorder %s28, 1
      %p177 = por %p175, %p176
      %p179 = scmp.ne.s32.totalorder %s164, %s178
      %p180 = scmp.eq.s32.totalorder %s28, 0
      %p181 = por %p179, %p180
      %s183 = sadd.s32 %s182, 1
      %p186 = scmp.eq.s32.totalorder %s22, 1
      %p187 = scmp.ne.s32.totalorder %s182, %s184
      %p188 = scmp.eq.s32.totalorder %s22, 0
      %p189 = por %p187, %p188
      %p190 = scmp.ne.s32.totalorder %s182, %s184
      %p191 = scmp.eq.s32.totalorder %s27, 1
      %p192 = por %p190, %p191
      %p193 = scmp.ne.s32.totalorder %s184, %s185
      %p194 = scmp.eq.s32.totalorder %s27, 0
      %p195 = por %p193, %p194
      %p196 = scmp.ne.s32.totalorder %s184, %s185
      %p197 = scmp.eq.s32.totalorder %s28, 1
      %p198 = por %p196, %p197
      %p200 = scmp.ne.s32.totalorder %s185, %s199
      %p201 = scmp.eq.s32.totalorder %s28, 0
      %p202 = por %p200, %p201
      %s204 = sadd.s32 %s203, 1
      %p207 = scmp.eq.s32.totalorder %s22, 1
      %p208 = scmp.ne.s32.totalorder %s203, %s205
      %p209 = scmp.eq.s32.totalorder %s22, 0
      %p210 = por %p208, %p209
      %p211 = scmp.ne.s32.totalorder %s203, %s205
      %p212 = scmp.eq.s32.totalorder %s27, 1
      %p213 = por %p211, %p212
      %p214 = scmp.ne.s32.totalorder %s205, %s206
      %p215 = scmp.eq.s32.totalorder %s27, 0
      %p216 = por %p214, %p215
      %p217 = scmp.ne.s32.totalorder %s205, %s206
      %p218 = scmp.eq.s32.totalorder %s28, 1
      %p219 = por %p217, %p218
      %p221 = scmp.ne.s32.totalorder %s206, %s220
      %p222 = scmp.eq.s32.totalorder %s28, 0
      %p223 = por %p221, %p222
      %s225 = sadd.s32 %s224, 1
      %p228 = scmp.eq.s32.totalorder %s22, 1
      %p229 = scmp.ne.s32.totalorder %s224, %s226
      %p230 = scmp.eq.s32.totalorder %s22, 0
      %p231 = por %p229, %p230
      %p232 = scmp.ne.s32.totalorder %s224, %s226
      %p233 = scmp.eq.s32.totalorder %s27, 1
      %p234 = por %p232, %p233
      %p235 = scmp.ne.s32.totalorder %s226, %s227
      %p236 = scmp.eq.s32.totalorder %s27, 0
      %p237 = por %p235, %p236
      %p238 = scmp.ne.s32.totalorder %s226, %s227
      %p239 = scmp.eq.s32.totalorder %s28, 1
      %p240 = por %p238, %p239
      %p242 = scmp.ne.s32.totalorder %s227, %s241
      %p243 = scmp.eq.s32.totalorder %s28, 0
      %p244 = por %p242, %p243
      %s246 = sadd.s32 %s245, 1
      %p249 = scmp.eq.s32.totalorder %s22, 1
      %p250 = scmp.ne.s32.totalorder %s245, %s247
      %p251 = scmp.eq.s32.totalorder %s22, 0
      %p252 = por %p250, %p251
      %p253 = scmp.ne.s32.totalorder %s245, %s247
      %p254 = scmp.eq.s32.totalorder %s27, 1
      %p255 = por %p253, %p254
      %p256 = scmp.ne.s32.totalorder %s247, %s248
      %p257 = scmp.eq.s32.totalorder %s27, 0
      %p258 = por %p256, %p257
      %p259 = scmp.ne.s32.totalorder %s247, %s248
      %p260 = scmp.eq.s32.totalorder %s28, 1
      %p261 = por %p259, %p260
      %p263 = scmp.ne.s32.totalorder %s248, %s262
      %p264 = scmp.eq.s32.totalorder %s28, 0
      %p265 = por %p263, %p264
      %s267 = sadd.s32 %s266, 1
      %p270 = scmp.eq.s32.totalorder %s22, 1
      %p271 = scmp.ne.s32.totalorder %s266, %s268
      %p272 = scmp.eq.s32.totalorder %s22, 0
      %p273 = por %p271, %p272
      %p274 = scmp.ne.s32.totalorder %s266, %s268
      %p275 = scmp.eq.s32.totalorder %s27, 1
      %p276 = por %p274, %p275
      %p277 = scmp.ne.s32.totalorder %s268, %s269
      %p278 = scmp.eq.s32.totalorder %s27, 0
      %p279 = por %p277, %p278
      %p280 = scmp.ne.s32.totalorder %s268, %s269
      %p281 = scmp.eq.s32.totalorder %s28, 1
      %p282 = por %p280, %p281
      %p284 = scmp.ne.s32.totalorder %s269, %s283
      %p285 = scmp.eq.s32.totalorder %s28, 0
      %p286 = por %p284, %p285
      %s288 = sadd.s32 %s287, 1
      %p291 = scmp.eq.s32.totalorder %s22, 1
      %p292 = scmp.ne.s32.totalorder %s287, %s289
      %p293 = scmp.eq.s32.totalorder %s22, 0
      %p294 = por %p292, %p293
      %p295 = scmp.ne.s32.totalorder %s287, %s289
      %p296 = scmp.eq.s32.totalorder %s27, 1
      %p297 = por %p295, %p296
      %p298 = scmp.ne.s32.totalorder %s289, %s290
      %p299 = scmp.eq.s32.totalorder %s27, 0
      %p300 = por %p298, %p299
      %p301 = scmp.ne.s32.totalorder %s289, %s290
      %p302 = scmp.eq.s32.totalorder %s28, 1
      %p303 = por %p301, %p302
      %p305 = scmp.ne.s32.totalorder %s290, %s304
      %p306 = scmp.eq.s32.totalorder %s28, 0
      %p307 = por %p305, %p306
      %s308 = ssub.s32 %s22, %s29
      %p309 = scmp.eq.s32.totalorder %s308, 0
      %s311 = sadd.s32 %s310, 1
      %s312 = scalar_select %p309, %s310, %s311
      %p315 = pneg %p309
      %p316 = scmp.eq.s32.totalorder %s22, 1
      %p317 = por %p315, %p316
      %p318 = scmp.ne.s32.totalorder %s310, %s313
      %p319 = scmp.eq.s32.totalorder %s22, 0
      %p320 = por %p318, %p319
      %p321 = scmp.ne.s32.totalorder %s310, %s313
      %p322 = scmp.eq.s32.totalorder %s27, 1
      %p323 = por %p321, %p322
      %p324 = scmp.ne.s32.totalorder %s313, %s314
      %p325 = scmp.eq.s32.totalorder %s27, 0
      %p326 = por %p324, %p325
      %p327 = scmp.ne.s32.totalorder %s313, %s314
      %p328 = scmp.eq.s32.totalorder %s28, 1
      %p329 = por %p327, %p328
      %p331 = scmp.ne.s32.totalorder %s314, %s330
      %p332 = scmp.eq.s32.totalorder %s28, 0
      %p333 = por %p331, %p332
      %p334 = scmp.le.s32.totalorder 1, %s22
      %p335 = scmp.lt.s32.totalorder %s22, 3
      %p336 = pnand %p334, %p335
      %p337 = pneg %p336
      // Predicated region
      $region9: #{net_short_circuit_forward.1} parent=5 // pred_check
        _
      $region10: #{net_short_circuit_forward.1} parent=5 // pred_check_branch
        %339 = sbr.rel (%p336) target = $region12
      $region11: #{net_short_circuit_forward.1} parent=5 // pred_region
        %s340 = ssub.s32 %s22, 1
        // Predicated region
        $region13: #{net_short_circuit_forward.1} parent=11 // pred_check
          %p341 = pneg %p69
        $region14: #{net_short_circuit_forward.1} parent=11 // pred_check_branch
          %343 = sbr.rel (%p341) target = $region16
        $region15: #{net_short_circuit_forward.1} parent=11 // pred_region
          _
        $region16: #{net_short_circuit_forward.1} parent=11 // pred_fallthru
          _
        // Predicated region
        $region17: #{net_short_circuit_forward.1} parent=11 // pred_check
          %p344 = pneg %p90
        $region18: #{net_short_circuit_forward.1} parent=11 // pred_check_branch
          %346 = sbr.rel (%p344) target = $region20
        $region19: #{net_short_circuit_forward.1} parent=11 // pred_region
          _
        $region20: #{net_short_circuit_forward.1} parent=11 // pred_fallthru
          _
        // Predicated region
        $region21: #{net_short_circuit_forward.1} parent=11 // pred_check
          %p347 = pneg %p111
        $region22: #{net_short_circuit_forward.1} parent=11 // pred_check_branch
          %349 = sbr.rel (%p347) target = $region24
        $region23: #{net_short_circuit_forward.1} parent=11 // pred_region
          _
        $region24: #{net_short_circuit_forward.1} parent=11 // pred_fallthru
          _
        // Predicated region
        $region25: #{net_short_circuit_forward.1} parent=11 // pred_check
          %p350 = pneg %p132
        $region26: #{net_short_circuit_forward.1} parent=11 // pred_check_branch
          %352 = sbr.rel (%p350) target = $region28
        $region27: #{net_short_circuit_forward.1} parent=11 // pred_region
          _
        $region28: #{net_short_circuit_forward.1} parent=11 // pred_fallthru
          _
        // Predicated region
        $region29: #{net_short_circuit_forward.1} parent=11 // pred_check
          %p353 = pneg %p153
        $region30: #{net_short_circuit_forward.1} parent=11 // pred_check_branch
          %355 = sbr.rel (%p353) target = $region32
        $region31: #{net_short_circuit_forward.1} parent=11 // pred_region
          _
        $region32: #{net_short_circuit_forward.1} parent=11 // pred_fallthru
          _
        // Predicated region
        $region33: #{net_short_circuit_forward.1} parent=11 // pred_check
          %p356 = pneg %p174
        $region34: #{net_short_circuit_forward.1} parent=11 // pred_check_branch
          %358 = sbr.rel (%p356) target = $region36
        $region35: #{net_short_circuit_forward.1} parent=11 // pred_region
          _
        $region36: #{net_short_circuit_forward.1} parent=11 // pred_fallthru
          _
        // Predicated region
        $region37: #{net_short_circuit_forward.1} parent=11 // pred_check
          %p359 = pneg %p195
        $region38: #{net_short_circuit_forward.1} parent=11 // pred_check_branch
          %361 = sbr.rel (%p359) target = $region40
        $region39: #{net_short_circuit_forward.1} parent=11 // pred_region
          _
        $region40: #{net_short_circuit_forward.1} parent=11 // pred_fallthru
          _
        // Predicated region
        $region41: #{net_short_circuit_forward.1} parent=11 // pred_check
          %p362 = pneg %p216
        $region42: #{net_short_circuit_forward.1} parent=11 // pred_check_branch
          %364 = sbr.rel (%p362) target = $region44
        $region43: #{net_short_circuit_forward.1} parent=11 // pred_region
          _
        $region44: #{net_short_circuit_forward.1} parent=11 // pred_fallthru
          _
        // Predicated region
        $region45: #{net_short_circuit_forward.1} parent=11 // pred_check
          %p365 = pneg %p237
        $region46: #{net_short_circuit_forward.1} parent=11 // pred_check_branch
          %367 = sbr.rel (%p365) target = $region48
        $region47: #{net_short_circuit_forward.1} parent=11 // pred_region
          _
        $region48: #{net_short_circuit_forward.1} parent=11 // pred_fallthru
          _
        // Predicated region
        $region49: #{net_short_circuit_forward.1} parent=11 // pred_check
          %p368 = pneg %p258
        $region50: #{net_short_circuit_forward.1} parent=11 // pred_check_branch
          %370 = sbr.rel (%p368) target = $region52
        $region51: #{net_short_circuit_forward.1} parent=11 // pred_region
          _
        $region52: #{net_short_circuit_forward.1} parent=11 // pred_fallthru
          _
        // Predicated region
        $region53: #{net_short_circuit_forward.1} parent=11 // pred_check
          %p371 = pneg %p279
        $region54: #{net_short_circuit_forward.1} parent=11 // pred_check_branch
          %373 = sbr.rel (%p371) target = $region56
        $region55: #{net_short_circuit_forward.1} parent=11 // pred_region
          _
        $region56: #{net_short_circuit_forward.1} parent=11 // pred_fallthru
          _
        // Predicated region
        $region57: #{net_short_circuit_forward.1} parent=11 // pred_check
          %p374 = pneg %p300
        $region58: #{net_short_circuit_forward.1} parent=11 // pred_check_branch
          %376 = sbr.rel (%p374) target = $region60
        $region59: #{net_short_circuit_forward.1} parent=11 // pred_region
          _
        $region60: #{net_short_circuit_forward.1} parent=11 // pred_fallthru
          _
      $region12: #{net_short_circuit_forward.1} parent=5 // pred_fallthru
        _
      %p377 = scmp.lt.s32.totalorder %s22, 2
      // Predicated region
      $region61: #{net_short_circuit_forward.1} parent=5 // pred_check
        %p378 = pneg %p377
      $region62: #{net_short_circuit_forward.1} parent=5 // pred_check_branch
        %380 = sbr.rel (%p378) target = $region64
      $region63: #{net_short_circuit_forward.1} parent=5 // pred_region
        // Predicated region
        $region65: #{net_short_circuit_forward.1} parent=63 // pred_check
          %p381 = pneg %p42
        $region66: #{net_short_circuit_forward.1} parent=63 // pred_check_branch
          %383 = sbr.rel (%p381) target = $region68
        $region67: #{net_short_circuit_forward.1} parent=63 // pred_region
          %p384 = scmp.lt.s32.totalorder %s22, 1
          %s385 = scalar_select %p384, %s22, 1
          %s386 = smul.addr %s385, 8
          %s387 = scalar_lea.vmem %s0, %s386
        $region68: #{net_short_circuit_forward.1} parent=63 // pred_fallthru
          _
      $region64: #{net_short_circuit_forward.1} parent=5 // pred_fallthru
        _
      %p388 = scmp.le.s32.totalorder 1, %s22
      %p389 = scmp.lt.s32.totalorder %s22, 3
      %p390 = pnand %p388, %p389
      %p391 = pneg %p390
      // Predicated region
      $region69: #{net_short_circuit_forward.1} parent=5 // pred_check
        _
      $region70: #{net_short_circuit_forward.1} parent=5 // pred_check_branch
        %393 = sbr.rel (%p390) target = $region72
      $region71: #{net_short_circuit_forward.1} parent=5 // pred_region
        %s394 = ssub.s32 %s22, 1
        %p395 = scmp.lt.s32.totalorder %s27, 1
        %s396 = scalar_select %p395, %s27, 1
        %s397 = smul.addr %s396, 8
        %s398 = scalar_lea.vmem %s0, %s397
        %p399 = pneg %p48
        %p400 = pneg %p45
        %p401 = pneg %p69
        %p402 = pneg %p66
        %p403 = pneg %p90
        %p404 = pneg %p87
        %p405 = pneg %p111
        %p406 = pneg %p108
        %p407 = pneg %p132
        %p408 = pneg %p129
        %p409 = pneg %p153
        %p410 = pneg %p150
        %p411 = pneg %p174
        %p412 = pneg %p171
        %p413 = pneg %p195
        %p414 = pneg %p192
        %p415 = pneg %p216
        %p416 = pneg %p213
        %p417 = pneg %p237
        %p418 = pneg %p234
        %p419 = pneg %p258
        %p420 = pneg %p255
        %p421 = pneg %p279
        %p422 = pneg %p276
        %p423 = pneg %p300
        %p424 = pneg %p297
        %p425 = pneg %p326
        %p426 = pneg %p323
        %s427 = sand.u32 %s313, 1
        %s428 = scalar_lea.sflag [#allocation3], %s427
        %s429 = sand.u32 %s313, 1
        %s430 = smul.addr %s429, 24
        %s431 = scalar_lea.vmem [#allocation2], %s430
        %p432 = scmp.lt.s32.totalorder %s27, 1
        %s433 = scalar_select %p432, %s27, 1
        %s434 = smul.addr %s433, 8
        %s435 = scalar_lea.vmem %s0, %s434
        %v437 = vld [vmem:[%s435] sm:$0xff]
        %v438 = vpack.c.bf16 %v437, %v437
        %v439 = vld [vmem:[%s1] sm:$0xf]
        %v440 = vld [vmem:[%s1 + $0x4] sm:$0xf]
        %v441 = vld [vmem:[%s2] sm:$0x1]
        %v443 = vlaneseq
        %v444 = vshrl.u32 %v443, 7
        %v445 = vsub.s32 0, %v444
        %v446 = vrot.slane %v441, %v445
        %v450 = vunpack.c.l.b16 %v439
        %v451 = vunpack.c.l.b16 %v440
        %v452 = vpack.c.b16 %v451, %v450
        %vm454 = vcmask 130048
        %v456 = vsel %vm454, %v438, 0
        %458 = vmatprep.subr.bf16.mxu0 0
        %459 = vmatpush1.bf16.msra.mxu0 %v452
        %460 = vmatprep.subr.bf16.mxu0 0
        %461 = vmatpush1.bf16.msra.mxu0 0
        %462 = vmatprep.subr.bf16.mxu0 0
        %463 = vmatpush1.bf16.msra.mxu0 0
        %464 = vmatprep.subr.bf16.mxu0 0
        %465 = vmatpush1.bf16.msra.mxu0 0
        %466 = vmatprep.subr.bf16.mxu0 0
        %467 = vmatpush1.bf16.msra.mxu0 0
        %468 = vmatprep.subr.bf16.mxu0 0
        %469 = vmatpush1.bf16.msra.mxu0 0
        %470 = vmatprep.subr.bf16.mxu0 0
        %471 = vmatpush1.bf16.msra.mxu0 0
        %472 = vmatprep.subr.bf16.mxu0 0
        %473 = vmatpush1.bf16.msra.mxu0 0
        %474 = vmatprep.subr.bf16.mxu0 0
        %475 = vmatpush1.bf16.msra.mxu0 0
        %476 = vmatprep.subr.bf16.mxu0 0
        %477 = vmatpush1.bf16.msra.mxu0 0
        %478 = vmatprep.subr.bf16.mxu0 0
        %479 = vmatpush1.bf16.msra.mxu0 0
        %480 = vmatprep.subr.bf16.mxu0 0
        %481 = vmatpush1.bf16.msra.mxu0 0
        %482 = vmatprep.subr.bf16.mxu0 0
        %483 = vmatpush1.bf16.msra.mxu0 0
        %484 = vmatprep.subr.bf16.mxu0 0
        %485 = vmatpush1.bf16.msra.mxu0 0
        %486 = vmatprep.subr.bf16.mxu0 0
        %487 = vmatpush1.bf16.msra.mxu0 0
        %488 = vmatprep.subr.bf16.mxu0 0
        %489 = vmatpush1.bf16.msra.mxu0 0
        %490 = vmatprep.mubr.bf16.mxu0 0
        %491 = vmatmul.mubr.bf16.gmra.mrb[0].mxu0 %v456
        %v492 = vpop.f32.mrb[0].mxu0
        %v493 = vadd.f32 %v446, %v492
        %v494 = vpop.f32.mrb[0].mxu0
        %v495 = vpop.f32.mrb[0].mxu0
        %v496 = vpop.f32.mrb[0].mxu0
        %497 = vdwg.mxu0
        %v498 = vmax.f32 %v493, 0.0
        %v499 = vpack.c.bf16 %v498, %v498
        %v500 = vld [vmem:[%s3] sm:$0xff]
        %v501 = vld [vmem:[%s3 + $0x8] sm:$0xff]
        %v502 = vld [vmem:[%s3 + $0x10] sm:$0xff]
        %v503 = vld [vmem:[%s3 + $0x18] sm:$0xff]
        %v504 = vld [vmem:[%s3 + $0x20] sm:$0xff]
        %v505 = vld [vmem:[%s3 + $0x28] sm:$0xff]
        %v506 = vld [vmem:[%s3 + $0x30] sm:$0xff]
        %v507 = vld [vmem:[%s3 + $0x38] sm:$0xff]
        %v508 = vld [vmem:[%s3 + $0x40] sm:$0xff]
        %v509 = vld [vmem:[%s3 + $0x48] sm:$0xff]
        %v510 = vld [vmem:[%s3 + $0x50] sm:$0xff]
        %v511 = vld [vmem:[%s3 + $0x58] sm:$0xff]
        %v512 = vld [vmem:[%s3 + $0x60] sm:$0xff]
        %v513 = vld [vmem:[%s3 + $0x68] sm:$0xff]
        %v514 = vld [vmem:[%s3 + $0x70] sm:$0xff]
        %v515 = vld [vmem:[%s3 + $0x78] sm:$0xff]
        %v516 = vld [vmem:[%s4] sm:$0x3]
        %v518 = vlaneseq
        %v519 = vshrl.u32 %v518, 7
        %v520 = vsub.s32 0, %v519
        %v521 = vrot.slane %v516, %v520
        %v522 = vlaneseq
        %v523 = vshrl.u32 %v522, 7
        %v524 = vsub.s32 1, %v523
        %v525 = vrot.slane %v516, %v524
        %v544 = vunpack.c.l.b16 %v500
        %v545 = vunpack.c.h.b16 %v500
        %v546 = vunpack.c.l.b16 %v501
        %v547 = vunpack.c.h.b16 %v501
        %v548 = vunpack.c.l.b16 %v502
        %v549 = vunpack.c.h.b16 %v502
        %v550 = vunpack.c.l.b16 %v503
        %v551 = vunpack.c.h.b16 %v503
        %v552 = vunpack.c.l.b16 %v504
        %v553 = vunpack.c.h.b16 %v504
        %v554 = vunpack.c.l.b16 %v505
        %v555 = vunpack.c.h.b16 %v505
        %v556 = vunpack.c.l.b16 %v506
        %v557 = vunpack.c.h.b16 %v506
        %v558 = vunpack.c.l.b16 %v507
        %v559 = vunpack.c.h.b16 %v507
        %v560 = vunpack.c.l.b16 %v508
        %v561 = vunpack.c.h.b16 %v508
        %v562 = vunpack.c.l.b16 %v509
        %v563 = vunpack.c.h.b16 %v509
        %v564 = vunpack.c.l.b16 %v510
        %v565 = vunpack.c.h.b16 %v510
        %v566 = vunpack.c.l.b16 %v511
        %v567 = vunpack.c.h.b16 %v511
        %v568 = vunpack.c.l.b16 %v512
        %v569 = vunpack.c.h.b16 %v512
        %v570 = vunpack.c.l.b16 %v513
        %v571 = vunpack.c.h.b16 %v513
        %v572 = vunpack.c.l.b16 %v514
        %v573 = vunpack.c.h.b16 %v514
        %v574 = vunpack.c.l.b16 %v515
        %v575 = vunpack.c.h.b16 %v515
        %v576 = vpack.c.b16 %v546, %v544
        %v577 = vpack.c.b16 %v547, %v545
        %v578 = vpack.c.b16 %v550, %v548
        %v579 = vpack.c.b16 %v551, %v549
        %v580 = vpack.c.b16 %v554, %v552
        %v581 = vpack.c.b16 %v555, %v553
        %v582 = vpack.c.b16 %v558, %v556
        %v583 = vpack.c.b16 %v559, %v557
        %v584 = vpack.c.b16 %v562, %v560
        %v585 = vpack.c.b16 %v563, %v561
        %v586 = vpack.c.b16 %v566, %v564
        %v587 = vpack.c.b16 %v567, %v565
        %v588 = vpack.c.b16 %v570, %v568
        %v589 = vpack.c.b16 %v571, %v569
        %v590 = vpack.c.b16 %v574, %v572
        %v591 = vpack.c.b16 %v575, %v573
        %608 = vmatprep.subr.bf16.mxu0 %v577
        %609 = vmatpush1.bf16.msra.mxu0 %v576
        %610 = vmatprep.subr.bf16.mxu0 %v579
        %611 = vmatpush1.bf16.msra.mxu0 %v578
        %612 = vmatprep.subr.bf16.mxu0 %v581
        %613 = vmatpush1.bf16.msra.mxu0 %v580
        %614 = vmatprep.subr.bf16.mxu0 %v583
        %615 = vmatpush1.bf16.msra.mxu0 %v582
        %616 = vmatprep.subr.bf16.mxu0 %v585
        %617 = vmatpush1.bf16.msra.mxu0 %v584
        %618 = vmatprep.subr.bf16.mxu0 %v587
        %619 = vmatpush1.bf16.msra.mxu0 %v586
        %620 = vmatprep.subr.bf16.mxu0 %v589
        %621 = vmatpush1.bf16.msra.mxu0 %v588
        %622 = vmatprep.subr.bf16.mxu0 %v591
        %623 = vmatpush1.bf16.msra.mxu0 %v590
        %624 = vmatprep.subr.bf16.mxu0 0
        %625 = vmatpush1.bf16.msra.mxu0 0
        %626 = vmatprep.subr.bf16.mxu0 0
        %627 = vmatpush1.bf16.msra.mxu0 0
        %628 = vmatprep.subr.bf16.mxu0 0
        %629 = vmatpush1.bf16.msra.mxu0 0
        %630 = vmatprep.subr.bf16.mxu0 0
        %631 = vmatpush1.bf16.msra.mxu0 0
        %632 = vmatprep.subr.bf16.mxu0 0
        %633 = vmatpush1.bf16.msra.mxu0 0
        %634 = vmatprep.subr.bf16.mxu0 0
        %635 = vmatpush1.bf16.msra.mxu0 0
        %636 = vmatprep.subr.bf16.mxu0 0
        %637 = vmatpush1.bf16.msra.mxu0 0
        %638 = vmatprep.subr.bf16.mxu0 0
        %639 = vmatpush1.bf16.msra.mxu0 0
        %640 = vmatprep.mubr.bf16.mxu0 0
        %641 = vmatmul.mubr.bf16.gmra.mrb[0].mxu0 %v499
        %v642 = vpop.f32.mrb[0].mxu0
        %v643 = vadd.f32 %v521, %v642
        %v644 = vpop.f32.mrb[0].mxu0
        %v645 = vadd.f32 %v525, %v644
        %v646 = vpop.f32.mrb[0].mxu0
        %v647 = vpop.f32.mrb[0].mxu0
        %648 = vdwg.mxu0
        %v649 = vmax.f32 %v643, 0.0
        %v650 = vmax.f32 %v645, 0.0
        %v651 = vpack.c.bf16 %v649, %v649
        %v652 = vpack.c.bf16 %v650, %v650
        %v653 = vld [vmem:[%s5] sm:$0xf]
        %v654 = vld [vmem:[%s5 + $0x4] sm:$0xf]
        %v655 = vld [vmem:[%s5 + $0x8] sm:$0xf]
        %v656 = vld [vmem:[%s5 + $0xc] sm:$0xf]
        %v657 = vld [vmem:[%s5 + $0x10] sm:$0xf]
        %v658 = vld [vmem:[%s5 + $0x14] sm:$0xf]
        %v659 = vld [vmem:[%s5 + $0x18] sm:$0xf]
        %v660 = vld [vmem:[%s5 + $0x1c] sm:$0xf]
        %v661 = vld [vmem:[%s5 + $0x20] sm:$0xf]
        %v662 = vld [vmem:[%s5 + $0x24] sm:$0xf]
        %v663 = vld [vmem:[%s5 + $0x28] sm:$0xf]
        %v664 = vld [vmem:[%s5 + $0x2c] sm:$0xf]
        %v665 = vld [vmem:[%s5 + $0x30] sm:$0xf]
        %v666 = vld [vmem:[%s5 + $0x34] sm:$0xf]
        %v667 = vld [vmem:[%s5 + $0x38] sm:$0xf]
        %v668 = vld [vmem:[%s5 + $0x3c] sm:$0xf]
        %v669 = vld [vmem:[%s5 + $0x40] sm:$0xf]
        %v670 = vld [vmem:[%s5 + $0x44] sm:$0xf]
        %v671 = vld [vmem:[%s5 + $0x48] sm:$0xf]
        %v672 = vld [vmem:[%s5 + $0x4c] sm:$0xf]
        %v673 = vld [vmem:[%s5 + $0x50] sm:$0xf]
        %v674 = vld [vmem:[%s5 + $0x54] sm:$0xf]
        %v675 = vld [vmem:[%s5 + $0x58] sm:$0xf]
        %v676 = vld [vmem:[%s5 + $0x5c] sm:$0xf]
        %v677 = vld [vmem:[%s5 + $0x60] sm:$0xf]
        %v678 = vld [vmem:[%s5 + $0x64] sm:$0xf]
        %v679 = vld [vmem:[%s5 + $0x68] sm:$0xf]
        %v680 = vld [vmem:[%s5 + $0x6c] sm:$0xf]
        %v681 = vld [vmem:[%s5 + $0x70] sm:$0xf]
        %v682 = vld [vmem:[%s5 + $0x74] sm:$0xf]
        %v683 = vld [vmem:[%s5 + $0x78] sm:$0xf]
        %v684 = vld [vmem:[%s5 + $0x7c] sm:$0xf]
        %v685 = vld [vmem:[%s6] sm:$0x1]
        %v687 = vlaneseq
        %v688 = vshrl.u32 %v687, 7
        %v689 = vsub.s32 0, %v688
        %v690 = vrot.slane %v685, %v689
        %v724 = vunpack.c.l.b16 %v653
        %v725 = vunpack.c.l.b16 %v654
        %v726 = vunpack.c.l.b16 %v655
        %v727 = vunpack.c.l.b16 %v656
        %v728 = vunpack.c.l.b16 %v657
        %v729 = vunpack.c.l.b16 %v658
        %v730 = vunpack.c.l.b16 %v659
        %v731 = vunpack.c.l.b16 %v660
        %v732 = vunpack.c.l.b16 %v661
        %v733 = vunpack.c.l.b16 %v662
        %v734 = vunpack.c.l.b16 %v663
        %v735 = vunpack.c.l.b16 %v664
        %v736 = vunpack.c.l.b16 %v665
        %v737 = vunpack.c.l.b16 %v666
        %v738 = vunpack.c.l.b16 %v667
        %v739 = vunpack.c.l.b16 %v668
        %v740 = vunpack.c.l.b16 %v669
        %v741 = vunpack.c.l.b16 %v670
        %v742 = vunpack.c.l.b16 %v671
        %v743 = vunpack.c.l.b16 %v672
        %v744 = vunpack.c.l.b16 %v673
        %v745 = vunpack.c.l.b16 %v674
        %v746 = vunpack.c.l.b16 %v675
        %v747 = vunpack.c.l.b16 %v676
        %v748 = vunpack.c.l.b16 %v677
        %v749 = vunpack.c.l.b16 %v678
        %v750 = vunpack.c.l.b16 %v679
        %v751 = vunpack.c.l.b16 %v680
        %v752 = vunpack.c.l.b16 %v681
        %v753 = vunpack.c.l.b16 %v682
        %v754 = vunpack.c.l.b16 %v683
        %v755 = vunpack.c.l.b16 %v684
        %v756 = vpack.c.b16 %v725, %v724
        %v757 = vpack.c.b16 %v727, %v726
        %v758 = vpack.c.b16 %v729, %v728
        %v759 = vpack.c.b16 %v731, %v730
        %v760 = vpack.c.b16 %v733, %v732
        %v761 = vpack.c.b16 %v735, %v734
        %v762 = vpack.c.b16 %v737, %v736
        %v763 = vpack.c.b16 %v739, %v738
        %v764 = vpack.c.b16 %v741, %v740
        %v765 = vpack.c.b16 %v743, %v742
        %v766 = vpack.c.b16 %v745, %v744
        %v767 = vpack.c.b16 %v747, %v746
        %v768 = vpack.c.b16 %v749, %v748
        %v769 = vpack.c.b16 %v751, %v750
        %v770 = vpack.c.b16 %v753, %v752
        %v771 = vpack.c.b16 %v755, %v754
        %788 = vmatprep.subr.bf16.mxu0 0
        %789 = vmatpush1.bf16.msra.mxu0 %v756
        %790 = vmatprep.subr.bf16.mxu0 0
        %791 = vmatpush1.bf16.msra.mxu0 %v757
        %792 = vmatprep.subr.bf16.mxu0 0
        %793 = vmatpush1.bf16.msra.mxu0 %v758
        %794 = vmatprep.subr.bf16.mxu0 0
        %795 = vmatpush1.bf16.msra.mxu0 %v759
        %796 = vmatprep.subr.bf16.mxu0 0
        %797 = vmatpush1.bf16.msra.mxu0 %v760
        %798 = vmatprep.subr.bf16.mxu0 0
        %799 = vmatpush1.bf16.msra.mxu0 %v761
        %800 = vmatprep.subr.bf16.mxu0 0
        %801 = vmatpush1.bf16.msra.mxu0 %v762
        %802 = vmatprep.subr.bf16.mxu0 0
        %803 = vmatpush1.bf16.msra.mxu0 %v763
        %804 = vmatprep.subr.bf16.mxu0 0
        %805 = vmatpush1.bf16.msra.mxu0 %v764
        %806 = vmatprep.subr.bf16.mxu0 0
        %807 = vmatpush1.bf16.msra.mxu0 %v765
        %808 = vmatprep.subr.bf16.mxu0 0
        %809 = vmatpush1.bf16.msra.mxu0 %v766
        %810 = vmatprep.subr.bf16.mxu0 0
        %811 = vmatpush1.bf16.msra.mxu0 %v767
        %812 = vmatprep.subr.bf16.mxu0 0
        %813 = vmatpush1.bf16.msra.mxu0 %v768
        %814 = vmatprep.subr.bf16.mxu0 0
        %815 = vmatpush1.bf16.msra.mxu0 %v769
        %816 = vmatprep.subr.bf16.mxu0 0
        %817 = vmatpush1.bf16.msra.mxu0 %v770
        %818 = vmatprep.subr.bf16.mxu0 0
        %819 = vmatpush1.bf16.msra.mxu0 %v771
        %820 = vmatprep.mubr.bf16.mxu0 %v652
        %821 = vmatmul.mubr.bf16.gmra.mrb[0].mxu0 %v651
        %v822 = vpop.f32.mrb[0].mxu0
        %v823 = vadd.f32 %v690, %v822
        %v824 = vpop.f32.mrb[0].mxu0
        %v825 = vpop.f32.mrb[0].mxu0
        %v826 = vpop.f32.mrb[0].mxu0
        %827 = vdwg.mxu0
        %v828 = vmax.f32 %v823, 0.0
        %v829 = vpack.c.bf16 %v828, %v828
        %v830 = vld [vmem:[%s7] sm:$0xf]
        %v831 = vld [vmem:[%s7 + $0x4] sm:$0xf]
        %v832 = vld [vmem:[%s7 + $0x8] sm:$0xf]
        %v833 = vld [vmem:[%s7 + $0xc] sm:$0xf]
        %v834 = vld [vmem:[%s7 + $0x10] sm:$0xf]
        %v835 = vld [vmem:[%s7 + $0x14] sm:$0xf]
        %v836 = vld [vmem:[%s7 + $0x18] sm:$0xf]
        %v837 = vld [vmem:[%s7 + $0x1c] sm:$0xf]
        %v838 = vld [vmem:[%s7 + $0x20] sm:$0xf]
        %v839 = vld [vmem:[%s7 + $0x24] sm:$0xf]
        %v840 = vld [vmem:[%s7 + $0x28] sm:$0xf]
        %v841 = vld [vmem:[%s7 + $0x2c] sm:$0xf]
        %v842 = vld [vmem:[%s7 + $0x30] sm:$0xf]
        %v843 = vld [vmem:[%s7 + $0x34] sm:$0xf]
        %v844 = vld [vmem:[%s7 + $0x38] sm:$0xf]
        %v845 = vld [vmem:[%s7 + $0x3c] sm:$0xf]
        %v846 = vld [vmem:[%s8] sm:$0x1]
        %v848 = vlaneseq
        %v849 = vshrl.u32 %v848, 7
        %v850 = vsub.s32 0, %v849
        %v851 = vrot.slane %v846, %v850
        %v869 = vunpack.c.l.b16 %v830
        %v870 = vunpack.c.l.b16 %v831
        %v871 = vunpack.c.l.b16 %v832
        %v872 = vunpack.c.l.b16 %v833
        %v873 = vunpack.c.l.b16 %v834
        %v874 = vunpack.c.l.b16 %v835
        %v875 = vunpack.c.l.b16 %v836
        %v876 = vunpack.c.l.b16 %v837
        %v877 = vunpack.c.l.b16 %v838
        %v878 = vunpack.c.l.b16 %v839
        %v879 = vunpack.c.l.b16 %v840
        %v880 = vunpack.c.l.b16 %v841
        %v881 = vunpack.c.l.b16 %v842
        %v882 = vunpack.c.l.b16 %v843
        %v883 = vunpack.c.l.b16 %v844
        %v884 = vunpack.c.l.b16 %v845
        %v885 = vpack.c.b16 %v870, %v869
        %v886 = vpack.c.b16 %v872, %v871
        %v887 = vpack.c.b16 %v874, %v873
        %v888 = vpack.c.b16 %v876, %v875
        %v889 = vpack.c.b16 %v878, %v877
        %v890 = vpack.c.b16 %v880, %v879
        %v891 = vpack.c.b16 %v882, %v881
        %v892 = vpack.c.b16 %v884, %v883
        %901 = vmatprep.subr.bf16.mxu0 0
        %902 = vmatpush1.bf16.msra.mxu0 %v885
        %903 = vmatprep.subr.bf16.mxu0 0
        %904 = vmatpush1.bf16.msra.mxu0 %v886
        %905 = vmatprep.subr.bf16.mxu0 0
        %906 = vmatpush1.bf16.msra.mxu0 %v887
        %907 = vmatprep.subr.bf16.mxu0 0
        %908 = vmatpush1.bf16.msra.mxu0 %v888
        %909 = vmatprep.subr.bf16.mxu0 0
        %910 = vmatpush1.bf16.msra.mxu0 %v889
        %911 = vmatprep.subr.bf16.mxu0 0
        %912 = vmatpush1.bf16.msra.mxu0 %v890
        %913 = vmatprep.subr.bf16.mxu0 0
        %914 = vmatpush1.bf16.msra.mxu0 %v891
        %915 = vmatprep.subr.bf16.mxu0 0
        %916 = vmatpush1.bf16.msra.mxu0 %v892
        %917 = vmatprep.subr.bf16.mxu0 0
        %918 = vmatpush1.bf16.msra.mxu0 0
        %919 = vmatprep.subr.bf16.mxu0 0
        %920 = vmatpush1.bf16.msra.mxu0 0
        %921 = vmatprep.subr.bf16.mxu0 0
        %922 = vmatpush1.bf16.msra.mxu0 0
        %923 = vmatprep.subr.bf16.mxu0 0
        %924 = vmatpush1.bf16.msra.mxu0 0
        %925 = vmatprep.subr.bf16.mxu0 0
        %926 = vmatpush1.bf16.msra.mxu0 0
        %927 = vmatprep.subr.bf16.mxu0 0
        %928 = vmatpush1.bf16.msra.mxu0 0
        %929 = vmatprep.subr.bf16.mxu0 0
        %930 = vmatpush1.bf16.msra.mxu0 0
        %931 = vmatprep.subr.bf16.mxu0 0
        %932 = vmatpush1.bf16.msra.mxu0 0
        %933 = vmatprep.mubr.bf16.mxu0 0
        %934 = vmatmul.mubr.bf16.gmra.mrb[0].mxu0 %v829
        %v935 = vpop.f32.mrb[0].mxu0
        %v936 = vadd.f32 %v851, %v935
        %v937 = vpop.f32.mrb[0].mxu0
        %v938 = vpop.f32.mrb[0].mxu0
        %v939 = vpop.f32.mrb[0].mxu0
        %940 = vdwg.mxu0
        %v941 = vmax.f32 %v936, 0.0
        %v942 = vpack.c.bf16 %v941, %v941
        %v943 = vld [vmem:[%s9] sm:$0xff]
        %v944 = vld [vmem:[%s9 + $0x8] sm:$0xff]
        %v945 = vld [vmem:[%s9 + $0x10] sm:$0xff]
        %v946 = vld [vmem:[%s9 + $0x18] sm:$0xff]
        %v947 = vld [vmem:[%s9 + $0x20] sm:$0xff]
        %v948 = vld [vmem:[%s9 + $0x28] sm:$0xff]
        %v949 = vld [vmem:[%s9 + $0x30] sm:$0xff]
        %v950 = vld [vmem:[%s9 + $0x38] sm:$0xff]
        %v951 = vld [vmem:[%s9 + $0x40] sm:$0xff]
        %v952 = vld [vmem:[%s9 + $0x48] sm:$0xff]
        %v953 = vld [vmem:[%s9 + $0x50] sm:$0xff]
        %v954 = vld [vmem:[%s9 + $0x58] sm:$0xff]
        %v955 = vld [vmem:[%s9 + $0x60] sm:$0xff]
        %v956 = vld [vmem:[%s9 + $0x68] sm:$0xff]
        %v957 = vld [vmem:[%s9 + $0x70] sm:$0xff]
        %v958 = vld [vmem:[%s9 + $0x78] sm:$0xff]
        %v959 = vld [vmem:[%s10] sm:$0x3]
        %v961 = vlaneseq
        %v962 = vshrl.u32 %v961, 7
        %v963 = vsub.s32 0, %v962
        %v964 = vrot.slane %v959, %v963
        %v965 = vlaneseq
        %v966 = vshrl.u32 %v965, 7
        %v967 = vsub.s32 1, %v966
        %v968 = vrot.slane %v959, %v967
        %v987 = vunpack.c.l.b16 %v943
        %v988 = vunpack.c.h.b16 %v943
        %v989 = vunpack.c.l.b16 %v944
        %v990 = vunpack.c.h.b16 %v944
        %v991 = vunpack.c.l.b16 %v945
        %v992 = vunpack.c.h.b16 %v945
        %v993 = vunpack.c.l.b16 %v946
        %v994 = vunpack.c.h.b16 %v946
        %v995 = vunpack.c.l.b16 %v947
        %v996 = vunpack.c.h.b16 %v947
        %v997 = vunpack.c.l.b16 %v948
        %v998 = vunpack.c.h.b16 %v948
        %v999 = vunpack.c.l.b16 %v949
        %v1000 = vunpack.c.h.b16 %v949
        %v1001 = vunpack.c.l.b16 %v950
        %v1002 = vunpack.c.h.b16 %v950
        %v1003 = vunpack.c.l.b16 %v951
        %v1004 = vunpack.c.h.b16 %v951
        %v1005 = vunpack.c.l.b16 %v952
        %v1006 = vunpack.c.h.b16 %v952
        %v1007 = vunpack.c.l.b16 %v953
        %v1008 = vunpack.c.h.b16 %v953
        %v1009 = vunpack.c.l.b16 %v954
        %v1010 = vunpack.c.h.b16 %v954
        %v1011 = vunpack.c.l.b16 %v955
        %v1012 = vunpack.c.h.b16 %v955
        %v1013 = vunpack.c.l.b16 %v956
        %v1014 = vunpack.c.h.b16 %v956
        %v1015 = vunpack.c.l.b16 %v957
        %v1016 = vunpack.c.h.b16 %v957
        %v1017 = vunpack.c.l.b16 %v958
        %v1018 = vunpack.c.h.b16 %v958
        %v1019 = vpack.c.b16 %v989, %v987
        %v1020 = vpack.c.b16 %v990, %v988
        %v1021 = vpack.c.b16 %v993, %v991
        %v1022 = vpack.c.b16 %v994, %v992
        %v1023 = vpack.c.b16 %v997, %v995
        %v1024 = vpack.c.b16 %v998, %v996
        %v1025 = vpack.c.b16 %v1001, %v999
        %v1026 = vpack.c.b16 %v1002, %v1000
        %v1027 = vpack.c.b16 %v1005, %v1003
        %v1028 = vpack.c.b16 %v1006, %v1004
        %v1029 = vpack.c.b16 %v1009, %v1007
        %v1030 = vpack.c.b16 %v1010, %v1008
        %v1031 = vpack.c.b16 %v1013, %v1011
        %v1032 = vpack.c.b16 %v1014, %v1012
        %v1033 = vpack.c.b16 %v1017, %v1015
        %v1034 = vpack.c.b16 %v1018, %v1016
        %1051 = vmatprep.subr.bf16.mxu0 %v1020
        %1052 = vmatpush1.bf16.msra.mxu0 %v1019
        %1053 = vmatprep.subr.bf16.mxu0 %v1022
        %1054 = vmatpush1.bf16.msra.mxu0 %v1021
        %1055 = vmatprep.subr.bf16.mxu0 %v1024
        %1056 = vmatpush1.bf16.msra.mxu0 %v1023
        %1057 = vmatprep.subr.bf16.mxu0 %v1026
        %1058 = vmatpush1.bf16.msra.mxu0 %v1025
        %1059 = vmatprep.subr.bf16.mxu0 %v1028
        %1060 = vmatpush1.bf16.msra.mxu0 %v1027
        %1061 = vmatprep.subr.bf16.mxu0 %v1030
        %1062 = vmatpush1.bf16.msra.mxu0 %v1029
        %1063 = vmatprep.subr.bf16.mxu0 %v1032
        %1064 = vmatpush1.bf16.msra.mxu0 %v1031
        %1065 = vmatprep.subr.bf16.mxu0 %v1034
        %1066 = vmatpush1.bf16.msra.mxu0 %v1033
        %1067 = vmatprep.subr.bf16.mxu0 0
        %1068 = vmatpush1.bf16.msra.mxu0 0
        %1069 = vmatprep.subr.bf16.mxu0 0
        %1070 = vmatpush1.bf16.msra.mxu0 0
        %1071 = vmatprep.subr.bf16.mxu0 0
        %1072 = vmatpush1.bf16.msra.mxu0 0
        %1073 = vmatprep.subr.bf16.mxu0 0
        %1074 = vmatpush1.bf16.msra.mxu0 0
        %1075 = vmatprep.subr.bf16.mxu0 0
        %1076 = vmatpush1.bf16.msra.mxu0 0
        %1077 = vmatprep.subr.bf16.mxu0 0
        %1078 = vmatpush1.bf16.msra.mxu0 0
        %1079 = vmatprep.subr.bf16.mxu0 0
        %1080 = vmatpush1.bf16.msra.mxu0 0
        %1081 = vmatprep.subr.bf16.mxu0 0
        %1082 = vmatpush1.bf16.msra.mxu0 0
        %1083 = vmatprep.mubr.bf16.mxu0 0
        %1084 = vmatmul.mubr.bf16.gmra.mrb[0].mxu0 %v942
        %v1085 = vpop.f32.mrb[0].mxu0
        %v1086 = vadd.f32 %v964, %v1085
        %v1087 = vpop.f32.mrb[0].mxu0
        %v1088 = vadd.f32 %v968, %v1087
        %v1089 = vpop.f32.mrb[0].mxu0
        %v1090 = vpop.f32.mrb[0].mxu0
        %1091 = vdwg.mxu0
        %v1092 = vmax.f32 %v1086, 0.0
        %v1093 = vmax.f32 %v1088, 0.0
        %v1094 = vpack.c.bf16 %v1092, %v1092
        %v1095 = vpack.c.bf16 %v1093, %v1093
        %v1096 = vld [vmem:[%s11] sm:$0xff]
        %v1097 = vld [vmem:[%s11 + $0x8] sm:$0xf]
        %v1098 = vld [vmem:[%s11 + $0xc] sm:$0xff]
        %v1099 = vld [vmem:[%s11 + $0x14] sm:$0xf]
        %v1100 = vld [vmem:[%s11 + $0x18] sm:$0xff]
        %v1101 = vld [vmem:[%s11 + $0x20] sm:$0xf]
        %v1102 = vld [vmem:[%s11 + $0x24] sm:$0xff]
        %v1103 = vld [vmem:[%s11 + $0x2c] sm:$0xf]
        %v1104 = vld [vmem:[%s11 + $0x30] sm:$0xff]
        %v1105 = vld [vmem:[%s11 + $0x38] sm:$0xf]
        %v1106 = vld [vmem:[%s11 + $0x3c] sm:$0xff]
        %v1107 = vld [vmem:[%s11 + $0x44] sm:$0xf]
        %v1108 = vld [vmem:[%s11 + $0x48] sm:$0xff]
        %v1109 = vld [vmem:[%s11 + $0x50] sm:$0xf]
        %v1110 = vld [vmem:[%s11 + $0x54] sm:$0xff]
        %v1111 = vld [vmem:[%s11 + $0x5c] sm:$0xf]
        %v1112 = vld [vmem:[%s11 + $0x60] sm:$0xff]
        %v1113 = vld [vmem:[%s11 + $0x68] sm:$0xf]
        %v1114 = vld [vmem:[%s11 + $0x6c] sm:$0xff]
        %v1115 = vld [vmem:[%s11 + $0x74] sm:$0xf]
        %v1116 = vld [vmem:[%s11 + $0x78] sm:$0xff]
        %v1117 = vld [vmem:[%s11 + $0x80] sm:$0xf]
        %v1118 = vld [vmem:[%s11 + $0x84] sm:$0xff]
        %v1119 = vld [vmem:[%s11 + $0x8c] sm:$0xf]
        %v1120 = vld [vmem:[%s11 + $0x90] sm:$0xff]
        %v1121 = vld [vmem:[%s11 + $0x98] sm:$0xf]
        %v1122 = vld [vmem:[%s11 + $0x9c] sm:$0xff]
        %v1123 = vld [vmem:[%s11 + $0xa4] sm:$0xf]
        %v1124 = vld [vmem:[%s11 + $0xa8] sm:$0xff]
        %v1125 = vld [vmem:[%s11 + $0xb0] sm:$0xf]
        %v1126 = vld [vmem:[%s11 + $0xb4] sm:$0xff]
        %v1127 = vld [vmem:[%s11 + $0xbc] sm:$0xf]
        %v1128 = vld [vmem:[%s11 + $0xc0] sm:$0xff]
        %v1129 = vld [vmem:[%s11 + $0xc8] sm:$0xf]
        %v1130 = vld [vmem:[%s11 + $0xcc] sm:$0xff]
        %v1131 = vld [vmem:[%s11 + $0xd4] sm:$0xf]
        %v1132 = vld [vmem:[%s11 + $0xd8] sm:$0xff]
        %v1133 = vld [vmem:[%s11 + $0xe0] sm:$0xf]
        %v1134 = vld [vmem:[%s11 + $0xe4] sm:$0xff]
        %v1135 = vld [vmem:[%s11 + $0xec] sm:$0xf]
        %v1136 = vld [vmem:[%s11 + $0xf0] sm:$0xff]
        %v1137 = vld [vmem:[%s11 + $0xf8] sm:$0xf]
        %v1138 = vld [vmem:[%s11 + $0xfc] sm:$0xff]
        %v1139 = vld [vmem:[%s11 + $0x104] sm:$0xf]
        %v1140 = vld [vmem:[%s11 + $0x108] sm:$0xff]
        %v1141 = vld [vmem:[%s11 + $0x110] sm:$0xf]
        %v1142 = vld [vmem:[%s11 + $0x114] sm:$0xff]
        %v1143 = vld [vmem:[%s11 + $0x11c] sm:$0xf]
        %v1144 = vld [vmem:[%s11 + $0x120] sm:$0xff]
        %v1145 = vld [vmem:[%s11 + $0x128] sm:$0xf]
        %v1146 = vld [vmem:[%s11 + $0x12c] sm:$0xff]
        %v1147 = vld [vmem:[%s11 + $0x134] sm:$0xf]
        %v1148 = vld [vmem:[%s11 + $0x138] sm:$0xff]
        %v1149 = vld [vmem:[%s11 + $0x140] sm:$0xf]
        %v1150 = vld [vmem:[%s11 + $0x144] sm:$0xff]
        %v1151 = vld [vmem:[%s11 + $0x14c] sm:$0xf]
        %v1152 = vld [vmem:[%s11 + $0x150] sm:$0xff]
        %v1153 = vld [vmem:[%s11 + $0x158] sm:$0xf]
        %v1154 = vld [vmem:[%s11 + $0x15c] sm:$0xff]
        %v1155 = vld [vmem:[%s11 + $0x164] sm:$0xf]
        %v1156 = vld [vmem:[%s11 + $0x168] sm:$0xff]
        %v1157 = vld [vmem:[%s11 + $0x170] sm:$0xf]
        %v1158 = vld [vmem:[%s11 + $0x174] sm:$0xff]
        %v1159 = vld [vmem:[%s11 + $0x17c] sm:$0xf]
        %v1160 = vld [vmem:[%s12] sm:$0x7]
        %v1162 = vlaneseq
        %v1163 = vshrl.u32 %v1162, 7
        %v1164 = vsub.s32 0, %v1163
        %v1165 = vrot.slane %v1160, %v1164
        %v1166 = vlaneseq
        %v1167 = vshrl.u32 %v1166, 7
        %v1168 = vsub.s32 1, %v1167
        %v1169 = vrot.slane %v1160, %v1168
        %v1170 = vlaneseq
        %v1171 = vshrl.u32 %v1170, 7
        %v1172 = vsub.s32 2, %v1171
        %v1173 = vrot.slane %v1160, %v1172
        %v1241 = vunpack.c.l.b16 %v1096
        %v1242 = vunpack.c.h.b16 %v1096
        %v1243 = vunpack.c.l.b16 %v1097
        %v1244 = vunpack.c.l.b16 %v1098
        %v1245 = vunpack.c.h.b16 %v1098
        %v1246 = vunpack.c.l.b16 %v1099
        %v1247 = vunpack.c.l.b16 %v1100
        %v1248 = vunpack.c.h.b16 %v1100
        %v1249 = vunpack.c.l.b16 %v1101
        %v1250 = vunpack.c.l.b16 %v1102
        %v1251 = vunpack.c.h.b16 %v1102
        %v1252 = vunpack.c.l.b16 %v1103
        %v1253 = vunpack.c.l.b16 %v1104
        %v1254 = vunpack.c.h.b16 %v1104
        %v1255 = vunpack.c.l.b16 %v1105
        %v1256 = vunpack.c.l.b16 %v1106
        %v1257 = vunpack.c.h.b16 %v1106
        %v1258 = vunpack.c.l.b16 %v1107
        %v1259 = vunpack.c.l.b16 %v1108
        %v1260 = vunpack.c.h.b16 %v1108
        %v1261 = vunpack.c.l.b16 %v1109
        %v1262 = vunpack.c.l.b16 %v1110
        %v1263 = vunpack.c.h.b16 %v1110
        %v1264 = vunpack.c.l.b16 %v1111
        %v1265 = vunpack.c.l.b16 %v1112
        %v1266 = vunpack.c.h.b16 %v1112
        %v1267 = vunpack.c.l.b16 %v1113
        %v1268 = vunpack.c.l.b16 %v1114
        %v1269 = vunpack.c.h.b16 %v1114
        %v1270 = vunpack.c.l.b16 %v1115
        %v1271 = vunpack.c.l.b16 %v1116
        %v1272 = vunpack.c.h.b16 %v1116
        %v1273 = vunpack.c.l.b16 %v1117
        %v1274 = vunpack.c.l.b16 %v1118
        %v1275 = vunpack.c.h.b16 %v1118
        %v1276 = vunpack.c.l.b16 %v1119
        %v1277 = vunpack.c.l.b16 %v1120
        %v1278 = vunpack.c.h.b16 %v1120
        %v1279 = vunpack.c.l.b16 %v1121
        %v1280 = vunpack.c.l.b16 %v1122
        %v1281 = vunpack.c.h.b16 %v1122
        %v1282 = vunpack.c.l.b16 %v1123
        %v1283 = vunpack.c.l.b16 %v1124
        %v1284 = vunpack.c.h.b16 %v1124
        %v1285 = vunpack.c.l.b16 %v1125
        %v1286 = vunpack.c.l.b16 %v1126
        %v1287 = vunpack.c.h.b16 %v1126
        %v1288 = vunpack.c.l.b16 %v1127
        %v1289 = vunpack.c.l.b16 %v1128
        %v1290 = vunpack.c.h.b16 %v1128
        %v1291 = vunpack.c.l.b16 %v1129
        %v1292 = vunpack.c.l.b16 %v1130
        %v1293 = vunpack.c.h.b16 %v1130
        %v1294 = vunpack.c.l.b16 %v1131
        %v1295 = vunpack.c.l.b16 %v1132
        %v1296 = vunpack.c.h.b16 %v1132
        %v1297 = vunpack.c.l.b16 %v1133
        %v1298 = vunpack.c.l.b16 %v1134
        %v1299 = vunpack.c.h.b16 %v1134
        %v1300 = vunpack.c.l.b16 %v1135
        %v1301 = vunpack.c.l.b16 %v1136
        %v1302 = vunpack.c.h.b16 %v1136
        %v1303 = vunpack.c.l.b16 %v1137
        %v1304 = vunpack.c.l.b16 %v1138
        %v1305 = vunpack.c.h.b16 %v1138
        %v1306 = vunpack.c.l.b16 %v1139
        %v1307 = vunpack.c.l.b16 %v1140
        %v1308 = vunpack.c.h.b16 %v1140
        %v1309 = vunpack.c.l.b16 %v1141
        %v1310 = vunpack.c.l.b16 %v1142
        %v1311 = vunpack.c.h.b16 %v1142
        %v1312 = vunpack.c.l.b16 %v1143
        %v1313 = vunpack.c.l.b16 %v1144
        %v1314 = vunpack.c.h.b16 %v1144
        %v1315 = vunpack.c.l.b16 %v1145
        %v1316 = vunpack.c.l.b16 %v1146
        %v1317 = vunpack.c.h.b16 %v1146
        %v1318 = vunpack.c.l.b16 %v1147
        %v1319 = vunpack.c.l.b16 %v1148
        %v1320 = vunpack.c.h.b16 %v1148
        %v1321 = vunpack.c.l.b16 %v1149
        %v1322 = vunpack.c.l.b16 %v1150
        %v1323 = vunpack.c.h.b16 %v1150
        %v1324 = vunpack.c.l.b16 %v1151
        %v1325 = vunpack.c.l.b16 %v1152
        %v1326 = vunpack.c.h.b16 %v1152
        %v1327 = vunpack.c.l.b16 %v1153
        %v1328 = vunpack.c.l.b16 %v1154
        %v1329 = vunpack.c.h.b16 %v1154
        %v1330 = vunpack.c.l.b16 %v1155
        %v1331 = vunpack.c.l.b16 %v1156
        %v1332 = vunpack.c.h.b16 %v1156
        %v1333 = vunpack.c.l.b16 %v1157
        %v1334 = vunpack.c.l.b16 %v1158
        %v1335 = vunpack.c.h.b16 %v1158
        %v1336 = vunpack.c.l.b16 %v1159
        %v1337 = vpack.c.b16 %v1244, %v1241
        %v1338 = vpack.c.b16 %v1245, %v1242
        %v1339 = vpack.c.b16 %v1246, %v1243
        %v1340 = vpack.c.b16 %v1250, %v1247
        %v1341 = vpack.c.b16 %v1251, %v1248
        %v1342 = vpack.c.b16 %v1252, %v1249
        %v1343 = vpack.c.b16 %v1256, %v1253
        %v1344 = vpack.c.b16 %v1257, %v1254
        %v1345 = vpack.c.b16 %v1258, %v1255
        %v1346 = vpack.c.b16 %v1262, %v1259
        %v1347 = vpack.c.b16 %v1263, %v1260
        %v1348 = vpack.c.b16 %v1264, %v1261
        %v1349 = vpack.c.b16 %v1268, %v1265
        %v1350 = vpack.c.b16 %v1269, %v1266
        %v1351 = vpack.c.b16 %v1270, %v1267
        %v1352 = vpack.c.b16 %v1274, %v1271
        %v1353 = vpack.c.b16 %v1275, %v1272
        %v1354 = vpack.c.b16 %v1276, %v1273
        %v1355 = vpack.c.b16 %v1280, %v1277
        %v1356 = vpack.c.b16 %v1281, %v1278
        %v1357 = vpack.c.b16 %v1282, %v1279
        %v1358 = vpack.c.b16 %v1286, %v1283
        %v1359 = vpack.c.b16 %v1287, %v1284
        %v1360 = vpack.c.b16 %v1288, %v1285
        %v1361 = vpack.c.b16 %v1292, %v1289
        %v1362 = vpack.c.b16 %v1293, %v1290
        %v1363 = vpack.c.b16 %v1294, %v1291
        %v1364 = vpack.c.b16 %v1298, %v1295
        %v1365 = vpack.c.b16 %v1299, %v1296
        %v1366 = vpack.c.b16 %v1300, %v1297
        %v1367 = vpack.c.b16 %v1304, %v1301
        %v1368 = vpack.c.b16 %v1305, %v1302
        %v1369 = vpack.c.b16 %v1306, %v1303
        %v1370 = vpack.c.b16 %v1310, %v1307
        %v1371 = vpack.c.b16 %v1311, %v1308
        %v1372 = vpack.c.b16 %v1312, %v1309
        %v1373 = vpack.c.b16 %v1316, %v1313
        %v1374 = vpack.c.b16 %v1317, %v1314
        %v1375 = vpack.c.b16 %v1318, %v1315
        %v1376 = vpack.c.b16 %v1322, %v1319
        %v1377 = vpack.c.b16 %v1323, %v1320
        %v1378 = vpack.c.b16 %v1324, %v1321
        %v1379 = vpack.c.b16 %v1328, %v1325
        %v1380 = vpack.c.b16 %v1329, %v1326
        %v1381 = vpack.c.b16 %v1330, %v1327
        %v1382 = vpack.c.b16 %v1334, %v1331
        %v1383 = vpack.c.b16 %v1335, %v1332
        %v1384 = vpack.c.b16 %v1336, %v1333
        %1433 = vmatprep.subr.bf16.mxu0 %v1338
        %1434 = vmatpush1.bf16.msra.mxu0 %v1337
        %1435 = vmatprep.subr.bf16.mxu0 %v1341
        %1436 = vmatpush1.bf16.msra.mxu0 %v1340
        %1437 = vmatprep.subr.bf16.mxu0 %v1344
        %1438 = vmatpush1.bf16.msra.mxu0 %v1343
        %1439 = vmatprep.subr.bf16.mxu0 %v1347
        %1440 = vmatpush1.bf16.msra.mxu0 %v1346
        %1441 = vmatprep.subr.bf16.mxu0 %v1350
        %1442 = vmatpush1.bf16.msra.mxu0 %v1349
        %1443 = vmatprep.subr.bf16.mxu0 %v1353
        %1444 = vmatpush1.bf16.msra.mxu0 %v1352
        %1445 = vmatprep.subr.bf16.mxu0 %v1356
        %1446 = vmatpush1.bf16.msra.mxu0 %v1355
        %1447 = vmatprep.subr.bf16.mxu0 %v1359
        %1448 = vmatpush1.bf16.msra.mxu0 %v1358
        %1449 = vmatprep.subr.bf16.mxu0 %v1362
        %1450 = vmatpush1.bf16.msra.mxu0 %v1361
        %1451 = vmatprep.subr.bf16.mxu0 %v1365
        %1452 = vmatpush1.bf16.msra.mxu0 %v1364
        %1453 = vmatprep.subr.bf16.mxu0 %v1368
        %1454 = vmatpush1.bf16.msra.mxu0 %v1367
        %1455 = vmatprep.subr.bf16.mxu0 %v1371
        %1456 = vmatpush1.bf16.msra.mxu0 %v1370
        %1457 = vmatprep.subr.bf16.mxu0 %v1374
        %1458 = vmatpush1.bf16.msra.mxu0 %v1373
        %1459 = vmatprep.subr.bf16.mxu0 %v1377
        %1460 = vmatpush1.bf16.msra.mxu0 %v1376
        %1461 = vmatprep.subr.bf16.mxu0 %v1380
        %1462 = vmatpush1.bf16.msra.mxu0 %v1379
        %1463 = vmatprep.subr.bf16.mxu0 %v1383
        %1464 = vmatpush1.bf16.msra.mxu0 %v1382
        %1465 = vmatprep.mubr.bf16.mxu0 %v1095
        %1466 = vmatmul.mubr.bf16.gmra.mrb[0].mxu0 %v1094
        %v1467 = vpop.f32.mrb[0].mxu0
        %v1468 = vadd.f32 %v1165, %v1467
        %v1469 = vpop.f32.mrb[0].mxu0
        %v1470 = vadd.f32 %v1169, %v1469
        %v1471 = vpop.f32.mrb[0].mxu0
        %v1472 = vpop.f32.mrb[0].mxu0
        %1473 = vdwg.mxu0
        %1474 = vmatprep.subr.bf16.mxu0 0
        %1475 = vmatpush1.bf16.msra.mxu0 %v1339
        %1476 = vmatprep.subr.bf16.mxu0 0
        %1477 = vmatpush1.bf16.msra.mxu0 %v1342
        %1478 = vmatprep.subr.bf16.mxu0 0
        %1479 = vmatpush1.bf16.msra.mxu0 %v1345
        %1480 = vmatprep.subr.bf16.mxu0 0
        %1481 = vmatpush1.bf16.msra.mxu0 %v1348
        %1482 = vmatprep.subr.bf16.mxu0 0
        %1483 = vmatpush1.bf16.msra.mxu0 %v1351
        %1484 = vmatprep.subr.bf16.mxu0 0
        %1485 = vmatpush1.bf16.msra.mxu0 %v1354
        %1486 = vmatprep.subr.bf16.mxu0 0
        %1487 = vmatpush1.bf16.msra.mxu0 %v1357
        %1488 = vmatprep.subr.bf16.mxu0 0
        %1489 = vmatpush1.bf16.msra.mxu0 %v1360
        %1490 = vmatprep.subr.bf16.mxu0 0
        %1491 = vmatpush1.bf16.msra.mxu0 %v1363
        %1492 = vmatprep.subr.bf16.mxu0 0
        %1493 = vmatpush1.bf16.msra.mxu0 %v1366
        %1494 = vmatprep.subr.bf16.mxu0 0
        %1495 = vmatpush1.bf16.msra.mxu0 %v1369
        %1496 = vmatprep.subr.bf16.mxu0 0
        %1497 = vmatpush1.bf16.msra.mxu0 %v1372
        %1498 = vmatprep.subr.bf16.mxu0 0
        %1499 = vmatpush1.bf16.msra.mxu0 %v1375
        %1500 = vmatprep.subr.bf16.mxu0 0
        %1501 = vmatpush1.bf16.msra.mxu0 %v1378
        %1502 = vmatprep.subr.bf16.mxu0 0
        %1503 = vmatpush1.bf16.msra.mxu0 %v1381
        %1504 = vmatprep.subr.bf16.mxu0 0
        %1505 = vmatpush1.bf16.msra.mxu0 %v1384
        %1506 = vmatprep.mubr.bf16.mxu0 %v1095
        %1507 = vmatmul.mubr.bf16.gmra.mrb[0].mxu0 %v1094
        %v1508 = vpop.f32.mrb[0].mxu0
        %v1509 = vadd.f32 %v1173, %v1508
        %v1510 = vpop.f32.mrb[0].mxu0
        %v1511 = vpop.f32.mrb[0].mxu0
        %v1512 = vpop.f32.mrb[0].mxu0
        %1513 = vdwg.mxu0
        %1514 = vst [vmem:[%s431] sm:$0xff] %v1468
        %1515 = vst [vmem:[%s431 + $0x8] sm:$0xff] %v1470
        %vm1516 = vcmask 769024
        %1517 = vst.msk [vmem:[%s431 + $0x10] sm:$0xff] %vm1516, %v1509
        %s1518 = sand.u32 %s313, 1
        %s1519 = scalar_lea.sflag [#allocation3], %s1518
        %s1520 = sand.u32 %s313, 1
        %s1521 = smul.addr %s1520, 24
        %s1522 = scalar_lea.vmem [#allocation2], %s1521
        // Predicated region
        $region73: #{net_short_circuit_forward.1} parent=71 // pred_check
          %p1523 = pneg %p323
        $region74: #{net_short_circuit_forward.1} parent=71 // pred_check_branch
          %1525 = sbr.rel (%p1523) target = $region76
        $region75: #{net_short_circuit_forward.1} parent=71 // pred_region
          %s1527 = ssub.s32 384, 384
          %1528 = vsyncadd %s1519, %s1527
          %s1529 = smul.addr %s27, 3
          %s1530 = smul.addr %s1529, 128
          %s1531 = scalar_lea.hbm %s13, %s1530
          %s1533 = sshll.u32 %s1522, 4
          %s1534 = int_to_ptr.vmem [resolvable:$true] %s1533
          %1536 = dma.vmem_to_hbm [thread:$0]  %s1534, 384, %s1531, %s1519
        $region76: #{net_short_circuit_forward.1} parent=71 // pred_fallthru
          _
      $region72: #{net_short_circuit_forward.1} parent=5 // pred_fallthru
        _
      %p1537 = scmp.le.s32.totalorder 2, %s22
      // Predicated region
      $region77: #{net_short_circuit_forward.1} parent=5 // pred_check
        %p1538 = pneg %p1537
      $region78: #{net_short_circuit_forward.1} parent=5 // pred_check_branch
        %1540 = sbr.rel (%p1538) target = $region80
      $region79: #{net_short_circuit_forward.1} parent=5 // pred_region
        %s1541 = ssub.s32 %s22, 2
        // Predicated region
        $region81: #{net_short_circuit_forward.1} parent=79 // pred_check
          %p1542 = pneg %p329
        $region82: #{net_short_circuit_forward.1} parent=79 // pred_check_branch
          %1544 = sbr.rel (%p1542) target = $region84
        $region83: #{net_short_circuit_forward.1} parent=79 // pred_region
          %s1545 = sand.u32 %s314, 1
          %s1546 = scalar_lea.sflag [#allocation3], %s1545
          %s1547 = sand.u32 %s314, 1
          %s1548 = smul.addr %s1547, 24
          %s1549 = scalar_lea.vmem [#allocation2], %s1548
          %1550 = dma.done %s1546, 384
        $region84: #{net_short_circuit_forward.1} parent=79 // pred_fallthru
          _
      $region80: #{net_short_circuit_forward.1} parent=5 // pred_fallthru
        _
    $region6: #{net_short_circuit_forward.1} parent=1 // loop_footer
      %s26 = sadd.s32 1, %s22
    $region7: #{net_short_circuit_forward.1} parent=1 // loop_footer_branch
      %21 = sbr.rel target = $region3
    $region8: #{net_short_circuit_forward.1} parent=1 // loop_exit
      _
    %1551 = vsyncpa [#allocation3], 1
    %s1552 = scalar_lea.sflag [#allocation3], 1
    %1553 = vsyncpa %s1552, 1

</llo_original>
